<compile_context>
chip_gen: v5e
topology: v5e:2x2
jax: 0.10.0
libtpu: 0.0.40
codegen_flags: <defaults>
</compile_context>

<pallas_src>
import functools

import jax
import jax.numpy as jnp
from jax.experimental import pallas as pl
from jax.experimental.pallas import tpu as pltpu

D_IN, H1, H2, D_OUT = 3072, 200, 100, 10
# Lane-padded (multiples of 128) feature dims used inside the kernel.
H1P, H2P, D_OUT_P = 256, 128, 128


def mlp_kernel(x_ref, w1_ref, b1_ref, w2_ref, b2_ref, w3_ref, b3_ref, o_ref):
    # fc1 + ReLU: x arrives f32 from HBM; cast to bf16 here (no wrapper pass),
    # accumulate in f32 on the MXU.
    x = x_ref[...].astype(jnp.bfloat16)
    h = jnp.dot(x, w1_ref[...], preferred_element_type=jnp.float32)
    h = jnp.maximum(h + b1_ref[...], 0.0)
    # fc2 + ReLU (bf16 operands, f32 accumulation)
    h = jnp.dot(h.astype(jnp.bfloat16), w2_ref[...],
                preferred_element_type=jnp.float32)
    h = jnp.maximum(h + b2_ref[...], 0.0)
    # fc3 + ReLU
    h = jnp.dot(h.astype(jnp.bfloat16), w3_ref[...],
                preferred_element_type=jnp.float32)
    h = jnp.maximum(h + b3_ref[...], 0.0)
    o_ref[...] = h.astype(o_ref.dtype)


def _round_up(n, m):
    return ((n + m - 1) // m) * m


def _pad2(a, rows, cols):
    return jnp.pad(a, ((0, rows - a.shape[0]), (0, cols - a.shape[1])))


def prepare_params(params):
    """Zero-pad weights/biases to lane-dense shapes; cast weights to bf16.

    Call ONCE at init (not inside the per-call forward) so the pad/cast ops
    are not re-emitted under jit on every forward.
    Accepts biases shaped (H,) or (1, H).
    """
    w1, b1, w2, b2, w3, b3 = params
    b1 = jnp.reshape(b1, (1, -1))
    b2 = jnp.reshape(b2, (1, -1))
    b3 = jnp.reshape(b3, (1, -1))
    w1p = _pad2(w1, D_IN, H1P).astype(jnp.bfloat16)
    b1p = _pad2(b1, 1, H1P).astype(jnp.float32)
    w2p = _pad2(w2, H1P, H2P).astype(jnp.bfloat16)
    b2p = _pad2(b2, 1, H2P).astype(jnp.float32)
    w3p = _pad2(w3, H2P, D_OUT_P).astype(jnp.bfloat16)
    b3p = _pad2(b3, 1, D_OUT_P).astype(jnp.float32)
    return (w1p, b1p, w2p, b2p, w3p, b3p)


def mlp_forward(x, padded_params, *, tile_b=512):
    """x: (B, 3072) f32 -> (B, 10) f32.  padded_params from prepare_params."""
    B = x.shape[0]
    w1p, b1p, w2p, b2p, w3p, b3p = padded_params

    # Adaptive batch tile: multiple of 8 (f32 sublane), capped at tile_b.
    tb = min(tile_b, _round_up(B, 8))
    # Guarantee >= 2 grid steps whenever the batch allows it, so the
    # "parallel" batch axis can actually shard across v7x's two TensorCores.
    if B > 8 and tb >= B:
        tb = _round_up(pl.cdiv(B, 2), 8)
    grid = (pl.cdiv(B, tb),)   # ragged last block: masked output stores

    rep2d = lambda i: (0, 0)   # weights/biases resident across the batch grid

    x_bytes = B * D_IN * 4
    w_bytes = (w1p.size * 2 + b1p.size * 4 + w2p.size * 2 + b2p.size * 4 +
               w3p.size * 2 + b3p.size * 4)
    o_bytes = B * D_OUT_P * 4
    flops = 2 * B * (D_IN * H1P + H1P * H2P + H2P * D_OUT_P)

    out_padded = pl.pallas_call(
        mlp_kernel,
        out_shape=jax.ShapeDtypeStruct((B, D_OUT_P), jnp.float32),
        grid=grid,
        in_specs=[
            pl.BlockSpec((tb, D_IN), lambda i: (i, 0)),     # x tile (streamed, f32)
            pl.BlockSpec((D_IN, H1P), rep2d),               # w1 (bf16, resident)
            pl.BlockSpec((1, H1P), rep2d),                  # b1
            pl.BlockSpec((H1P, H2P), rep2d),                # w2
            pl.BlockSpec((1, H2P), rep2d),                  # b2
            pl.BlockSpec((H2P, D_OUT_P), rep2d),            # w3
            pl.BlockSpec((1, D_OUT_P), rep2d),              # b3
        ],
        out_specs=pl.BlockSpec((tb, D_OUT_P), lambda i: (i, 0)),  # lane-dense
        compiler_params=pltpu.CompilerParams(
            dimension_semantics=("parallel",),
            vmem_limit_bytes=32 * 1024 * 1024),
        cost_estimate=pl.CostEstimate(
            flops=flops, transcendentals=0,
            bytes_accessed=x_bytes + w_bytes + o_bytes),
    )(x, w1p, b1p, w2p, b2p, w3p, b3p)

    return out_padded[:, :D_OUT]


def init_params(key):
    """Deterministic init mimicking nn.Linear's U(-1/sqrt(fan_in), +1/sqrt(fan_in))."""
    ks = jax.random.split(key, 6)

    def linear(kw, kb, fan_in, fan_out):
        bound = 1.0 / jnp.sqrt(fan_in)
        w = jax.random.uniform(kw, (fan_in, fan_out), jnp.float32, -bound, bound)
        b = jax.random.uniform(kb, (fan_out,), jnp.float32, -bound, bound)
        return w, b

    w1, b1 = linear(ks[0], ks[1], D_IN, H1)
    w2, b2 = linear(ks[2], ks[3], H1, H2)
    w3, b3 = linear(ks[4], ks[5], H2, D_OUT)
    return (w1, b1, w2, b2, w3, b3)


def reference_forward(x, params, *, match_kernel=True):
    """Pure-JAX reference. match_kernel=True mirrors the kernel's bf16 dots."""
    w1, b1, w2, b2, w3, b3 = params
    b1 = jnp.reshape(b1, (1, -1))
    b2 = jnp.reshape(b2, (1, -1))
    b3 = jnp.reshape(b3, (1, -1))
    if match_kernel:
        dot = lambda a, w: jnp.dot(a.astype(jnp.bfloat16),
                                   w.astype(jnp.bfloat16),
                                   preferred_element_type=jnp.float32)
    else:
        dot = lambda a, w: a @ w
    h = jnp.maximum(dot(x, w1) + b1, 0.0)
    h = jnp.maximum(dot(h, w2) + b2, 0.0)
    return jnp.maximum(dot(h, w3) + b3, 0.0)


if __name__ == "__main__":
    key = jax.random.PRNGKey(0)
    k_params, k_x = jax.random.split(key)
    params = init_params(k_params)
    padded_params = prepare_params(params)   # hoisted: done once at init

    B = 16  # small batch; the wrapper adapts the batch tile / grid automatically
    x = jax.random.normal(k_x, (B, D_IN), jnp.float32)

    fwd = jax.jit(functools.partial(mlp_forward, tile_b=512))
    out = jax.block_until_ready(fwd(x, padded_params))

    # Tight check vs a reference using the same bf16-dot strategy, and a loose
    # check vs the full-f32 reference (accounts for bf16 rounding).
    ref_match = reference_forward(x, params, match_kernel=True)
    ref_f32 = reference_forward(x, params, match_kernel=False)
    assert out.shape == (B, D_OUT)
    assert jnp.allclose(out, ref_match, atol=2e-3, rtol=2e-3), \
        "mismatch vs matched (bf16) reference"
    assert jnp.allclose(out, ref_f32, atol=3e-2, rtol=3e-2), \
        "mismatch vs f32 reference"
    print("KERNEL_OK")
</pallas_src>

<mosaic_0001>
module attributes {stable_mosaic.version = 11 : i64} {
  func.func @mlp_kernel(%arg0: i32, %arg1: memref<8x3072xf32, #tpu.memory_space<vmem>>, %arg2: memref<3072x256xbf16, #tpu.memory_space<vmem>>, %arg3: memref<1x256xf32, #tpu.memory_space<vmem>>, %arg4: memref<256x128xbf16, #tpu.memory_space<vmem>>, %arg5: memref<1x128xf32, #tpu.memory_space<vmem>>, %arg6: memref<128x128xbf16, #tpu.memory_space<vmem>>, %arg7: memref<1x128xf32, #tpu.memory_space<vmem>>, %arg8: memref<8x128xf32, #tpu.memory_space<vmem>>) attributes {dimension_semantics = [#tpu.dimension_semantics<parallel>], iteration_bounds = array<i64: 2>, scalar_prefetch = 0 : i64, scratch_operands = 0 : i64, tpu.core_type = #tpu.core_type<tc>, window_params = [{transform_indices = @transform_0, window_bounds = array<i64: 8, 3072>}, {pipeline_mode = #tpu.pipeline_mode<synchronous>, transform_indices = @transform_1, window_bounds = array<i64: 3072, 256>}, {pipeline_mode = #tpu.pipeline_mode<synchronous>, transform_indices = @transform_2, window_bounds = array<i64: 1, 256>}, {pipeline_mode = #tpu.pipeline_mode<synchronous>, transform_indices = @transform_3, window_bounds = array<i64: 256, 128>}, {pipeline_mode = #tpu.pipeline_mode<synchronous>, transform_indices = @transform_4, window_bounds = array<i64: 1, 128>}, {pipeline_mode = #tpu.pipeline_mode<synchronous>, transform_indices = @transform_5, window_bounds = array<i64: 128, 128>}, {pipeline_mode = #tpu.pipeline_mode<synchronous>, transform_indices = @transform_6, window_bounds = array<i64: 1, 128>}, {transform_indices = @transform_7, window_bounds = array<i64: 8, 128>}]} {
    %c0 = arith.constant 0 : index
    %c0_0 = arith.constant 0 : index
    %0 = vector.load %arg1[%c0, %c0_0] : memref<8x3072xf32, #tpu.memory_space<vmem>>, vector<8x3072xf32>
    %1 = arith.truncf %0 : vector<8x3072xf32> to vector<8x3072xbf16>
    %c0_1 = arith.constant 0 : index
    %c0_2 = arith.constant 0 : index
    %2 = vector.load %arg2[%c0_1, %c0_2] : memref<3072x256xbf16, #tpu.memory_space<vmem>>, vector<3072x256xbf16>
    %cst = arith.constant dense<0.000000e+00> : vector<8x256xf32>
    %3 = tpu.matmul %1, %2, %cst {dimension_numbers = #tpu.dot_dimension_numbers<[1], [0], [0], [1], [0, 0, 1, 1], [], []>} : vector<8x3072xbf16>, vector<3072x256xbf16>, vector<8x256xf32> -> vector<8x256xf32>
    %c0_3 = arith.constant 0 : index
    %c0_4 = arith.constant 0 : index
    %4 = vector.load %arg3[%c0_3, %c0_4] : memref<1x256xf32, #tpu.memory_space<vmem>>, vector<1x256xf32>
    %5 = vector.broadcast %4 : vector<1x256xf32> to vector<8x256xf32>
    %6 = arith.addf %3, %5 : vector<8x256xf32>
    %cst_5 = arith.constant 0.000000e+00 : f32
    %7 = vector.broadcast %cst_5 : f32 to vector<8x256xf32>
    %8 = arith.maximumf %6, %7 : vector<8x256xf32>
    %9 = arith.truncf %8 : vector<8x256xf32> to vector<8x256xbf16>
    %c0_6 = arith.constant 0 : index
    %c0_7 = arith.constant 0 : index
    %10 = vector.load %arg4[%c0_6, %c0_7] : memref<256x128xbf16, #tpu.memory_space<vmem>>, vector<256x128xbf16>
    %cst_8 = arith.constant dense<0.000000e+00> : vector<8x128xf32>
    %11 = tpu.matmul %9, %10, %cst_8 {dimension_numbers = #tpu.dot_dimension_numbers<[1], [0], [0], [1], [0, 0, 1, 1], [], []>} : vector<8x256xbf16>, vector<256x128xbf16>, vector<8x128xf32> -> vector<8x128xf32>
    %c0_9 = arith.constant 0 : index
    %c0_10 = arith.constant 0 : index
    %12 = vector.load %arg5[%c0_9, %c0_10] : memref<1x128xf32, #tpu.memory_space<vmem>>, vector<1x128xf32>
    %13 = vector.broadcast %12 : vector<1x128xf32> to vector<8x128xf32>
    %14 = arith.addf %11, %13 : vector<8x128xf32>
    %cst_11 = arith.constant 0.000000e+00 : f32
    %15 = vector.broadcast %cst_11 : f32 to vector<8x128xf32>
    %16 = arith.maximumf %14, %15 : vector<8x128xf32>
    %17 = arith.truncf %16 : vector<8x128xf32> to vector<8x128xbf16>
    %c0_12 = arith.constant 0 : index
    %c0_13 = arith.constant 0 : index
    %18 = vector.load %arg6[%c0_12, %c0_13] : memref<128x128xbf16, #tpu.memory_space<vmem>>, vector<128x128xbf16>
    %cst_14 = arith.constant dense<0.000000e+00> : vector<8x128xf32>
    %19 = tpu.matmul %17, %18, %cst_14 {dimension_numbers = #tpu.dot_dimension_numbers<[1], [0], [0], [1], [0, 0, 1, 1], [], []>} : vector<8x128xbf16>, vector<128x128xbf16>, vector<8x128xf32> -> vector<8x128xf32>
    %c0_15 = arith.constant 0 : index
    %c0_16 = arith.constant 0 : index
    %20 = vector.load %arg7[%c0_15, %c0_16] : memref<1x128xf32, #tpu.memory_space<vmem>>, vector<1x128xf32>
    %21 = vector.broadcast %20 : vector<1x128xf32> to vector<8x128xf32>
    %22 = arith.addf %19, %21 : vector<8x128xf32>
    %cst_17 = arith.constant 0.000000e+00 : f32
    %23 = vector.broadcast %cst_17 : f32 to vector<8x128xf32>
    %24 = arith.maximumf %22, %23 : vector<8x128xf32>
    %c0_18 = arith.constant 0 : index
    %c0_19 = arith.constant 0 : index
    %25 = vector.load %arg8[%c0_18, %c0_19] : memref<8x128xf32, #tpu.memory_space<vmem>>, vector<8x128xf32>
    tpu.vector_store %arg8[%c0_18, %c0_19], %24 {strides = array<i32>} : memref<8x128xf32, #tpu.memory_space<vmem>>, vector<8x128xf32>,
    return
  }
  func.func @transform_0(%arg0: i32) -> (i32, i32) {
    %c0_i32 = arith.constant 0 : i32
    %c0_i32_0 = arith.constant 0 : i32
    return %arg0, %c0_i32 : i32, i32
  }
  func.func @transform_1(%arg0: i32) -> (i32, i32) {
    %c0_i32 = arith.constant 0 : i32
    %c0_i32_0 = arith.constant 0 : i32
    %c0_i32_1 = arith.constant 0 : i32
    return %c0_i32, %c0_i32_0 : i32, i32
  }
  func.func @transform_2(%arg0: i32) -> (i32, i32) {
    %c0_i32 = arith.constant 0 : i32
    %c0_i32_0 = arith.constant 0 : i32
    %c0_i32_1 = arith.constant 0 : i32
    return %c0_i32, %c0_i32_0 : i32, i32
  }
  func.func @transform_3(%arg0: i32) -> (i32, i32) {
    %c0_i32 = arith.constant 0 : i32
    %c0_i32_0 = arith.constant 0 : i32
    %c0_i32_1 = arith.constant 0 : i32
    return %c0_i32, %c0_i32_0 : i32, i32
  }
  func.func @transform_4(%arg0: i32) -> (i32, i32) {
    %c0_i32 = arith.constant 0 : i32
    %c0_i32_0 = arith.constant 0 : i32
    %c0_i32_1 = arith.constant 0 : i32
    return %c0_i32, %c0_i32_0 : i32, i32
  }
  func.func @transform_5(%arg0: i32) -> (i32, i32) {
    %c0_i32 = arith.constant 0 : i32
    %c0_i32_0 = arith.constant 0 : i32
    %c0_i32_1 = arith.constant 0 : i32
    return %c0_i32, %c0_i32_0 : i32, i32
  }
  func.func @transform_6(%arg0: i32) -> (i32, i32) {
    %c0_i32 = arith.constant 0 : i32
    %c0_i32_0 = arith.constant 0 : i32
    %c0_i32_1 = arith.constant 0 : i32
    return %c0_i32, %c0_i32_0 : i32, i32
  }
  func.func @transform_7(%arg0: i32) -> (i32, i32) {
    %c0_i32 = arith.constant 0 : i32
    %c0_i32_0 = arith.constant 0 : i32
    return %arg0, %c0_i32 : i32, i32
  }
}

</mosaic_0001>

<llo_original>
// kernel: mlp_forward.1
$region0: #{mlp_forward.1}
  #allocation0 [shape = 'u32[]', space=smem, size = 0x4, offset = 0x4, fixed_abs, tag = 'smem constant byte address 0x4 - core index']
  #allocation1 [shape = 'u32[72,128]{1,0:T(1,128)}', space=vmem, size = 0x9000, scoped, tag = 'internal scratch']
  %s0 = inlined_call_operand.hbm [shape: f32[16,3072], index: 0, kind: input, shape index: {}]
  %s1 = inlined_call_operand.hbm [shape: bf16[3072,256], index: 1, kind: input, shape index: {}]
  %s2 = inlined_call_operand.hbm [shape: f32[1,256], index: 2, kind: input, shape index: {}]
  %s3 = inlined_call_operand.hbm [shape: bf16[256,128], index: 3, kind: input, shape index: {}]
  %s4 = inlined_call_operand.hbm [shape: f32[1,128], index: 4, kind: input, shape index: {}]
  %s5 = inlined_call_operand.hbm [shape: bf16[128,128], index: 5, kind: input, shape index: {}]
  %s6 = inlined_call_operand.hbm [shape: f32[1,128], index: 6, kind: input, shape index: {}]
  %s7 = inlined_call_operand.hbm [shape: f32[16,128], index: 7, kind: output, shape index: {}]
  %s8 = sld [smem:[#allocation0]]
  $region89: #{mlp_forward.1} parent=0
    _
  %s10 = ssub.s32 1, %s8
  %s11 = scalar_select 0, %s10, %s8
  $region1: #{mlp_forward.1} parent=0
    #allocation2 [shape = 'u8[196608]{0}', space=vmem, size = 0x30000, scoped, tag = 'input window, operand 0']
    #allocation3 [shape = 's32[2]{0}', space=sflag, size = 0x8, scoped, tag = 'scoped memory for mlp_forward.1']
    #allocation4 [shape = 's32[2]{0}', space=sflag, size = 0x8, scoped, tag = 'scoped memory for mlp_forward.1']
    #allocation5 [shape = 'u8[1572864]{0}', space=vmem, size = 0x180000, scoped, tag = 'input window, operand 1, single buffered']
    #allocation6 [shape = 's32[1]{0}', space=sflag, size = 0x4, scoped, tag = 'scoped memory for mlp_forward.1']
    #allocation7 [shape = 'u8[1024]{0}', space=vmem, size = 0x400, scoped, tag = 'input window, operand 2, single buffered']
    #allocation8 [shape = 'u8[65536]{0}', space=vmem, size = 0x10000, scoped, tag = 'input window, operand 3, single buffered']
    #allocation9 [shape = 's32[1]{0}', space=sflag, size = 0x4, scoped, tag = 'scoped memory for mlp_forward.1']
    #allocation10 [shape = 'u8[512]{0}', space=vmem, size = 0x400, scoped, tag = 'input window, operand 4, single buffered']
    #allocation11 [shape = 'u8[32768]{0}', space=vmem, size = 0x8000, scoped, tag = 'input window, operand 5, single buffered']
    #allocation12 [shape = 's32[1]{0}', space=sflag, size = 0x4, scoped, tag = 'scoped memory for mlp_forward.1']
    #allocation13 [shape = 'u8[512]{0}', space=vmem, size = 0x400, scoped, tag = 'input window, operand 6, single buffered']
    #allocation14 [shape = 'u8[8192]{0}', space=vmem, size = 0x2000, scoped, tag = 'output window, operand 0']
    %12 = vsyncpa [#allocation3], 0
    %s13 = scalar_lea.sflag [#allocation3], 1
    %14 = vsyncpa %s13, 0
    %15 = vsyncpa [#allocation6], 0
    %16 = vsyncpa [#allocation9], 0
    %17 = vsyncpa [#allocation12], 0
    %18 = vsyncpa [#allocation4], 0
    %s19 = scalar_lea.sflag [#allocation4], 1
    %20 = vsyncpa %s19, 0
    loop: start=0, step=1, limit=4
    $region2: #{mlp_forward.1} parent=1 // loop_pre_header
      _
    $region3: #{mlp_forward.1} parent=1 // loop_header
      %s22 = sphi 0, %s26
      %p23 = scmp.ge.s32.totalorder %s22, 4
      %s32 = sphi 0, %s34
      %s35 = sphi 0, %s32
      %s36 = sphi 0, %s35
      %s52 = sphi 0, %s36
      %s56 = sphi 0, %s56
      %s58 = sphi 0, %s56
      %s59 = sphi 0, %s58
      %s73 = sphi 0, %s59
      %s77 = sphi 0, %s77
      %s79 = sphi 0, %s77
      %s80 = sphi 0, %s79
      %s94 = sphi 0, %s80
      %s98 = sphi 0, %s98
      %s100 = sphi 0, %s98
      %s101 = sphi 0, %s100
      %s115 = sphi 0, %s101
      %s119 = sphi 0, %s119
      %s121 = sphi 0, %s119
      %s122 = sphi 0, %s121
      %s136 = sphi 0, %s122
      %s140 = sphi 0, %s140
      %s142 = sphi 0, %s140
      %s143 = sphi 0, %s142
      %s157 = sphi 0, %s143
      %s161 = sphi 0, %s161
      %s163 = sphi 0, %s161
      %s164 = sphi 0, %s163
      %s178 = sphi 0, %s164
      %s184 = sphi 0, %s186
      %s187 = sphi 0, %s184
      %s188 = sphi 0, %s187
      %s204 = sphi 0, %s188
    $region4: #{mlp_forward.1} parent=1 // loop_header_branch
      %25 = sbr.rel (%p23) target = $region8
    $region5: #{mlp_forward.1} parent=1 // loop_body
      %s27 = ssub.s32 %s22, 1
      %s28 = ssub.s32 %s22, 2
      %s29 = sadd.s32 %s22, 1
      %s30 = ssub.s32 %s22, %s29
      %p31 = scmp.eq.s32.totalorder %s30, 0
      %s33 = sadd.s32 %s32, 1
      %s34 = scalar_select %p31, %s32, %s33
      %p37 = pneg %p31
      %p38 = scmp.eq.s32.totalorder %s22, 1
      %p39 = por %p37, %p38
      %p40 = scmp.ne.s32.totalorder %s32, %s35
      %p41 = scmp.eq.s32.totalorder %s22, 0
      %p42 = por %p40, %p41
      %p43 = scmp.ne.s32.totalorder %s32, %s35
      %p44 = scmp.eq.s32.totalorder %s27, 1
      %p45 = por %p43, %p44
      %p46 = scmp.ne.s32.totalorder %s35, %s36
      %p47 = scmp.eq.s32.totalorder %s27, 0
      %p48 = por %p46, %p47
      %p49 = scmp.ne.s32.totalorder %s35, %s36
      %p50 = scmp.eq.s32.totalorder %s28, 1
      %p51 = por %p49, %p50
      %p53 = scmp.ne.s32.totalorder %s36, %s52
      %p54 = scmp.eq.s32.totalorder %s28, 0
      %p55 = por %p53, %p54
      %s57 = sadd.s32 %s56, 1
      %p60 = scmp.eq.s32.totalorder %s22, 1
      %p61 = scmp.ne.s32.totalorder %s56, %s58
      %p62 = scmp.eq.s32.totalorder %s22, 0
      %p63 = por %p61, %p62
      %p64 = scmp.ne.s32.totalorder %s56, %s58
      %p65 = scmp.eq.s32.totalorder %s27, 1
      %p66 = por %p64, %p65
      %p67 = scmp.ne.s32.totalorder %s58, %s59
      %p68 = scmp.eq.s32.totalorder %s27, 0
      %p69 = por %p67, %p68
      %p70 = scmp.ne.s32.totalorder %s58, %s59
      %p71 = scmp.eq.s32.totalorder %s28, 1
      %p72 = por %p70, %p71
      %p74 = scmp.ne.s32.totalorder %s59, %s73
      %p75 = scmp.eq.s32.totalorder %s28, 0
      %p76 = por %p74, %p75
      %s78 = sadd.s32 %s77, 1
      %p81 = scmp.eq.s32.totalorder %s22, 1
      %p82 = scmp.ne.s32.totalorder %s77, %s79
      %p83 = scmp.eq.s32.totalorder %s22, 0
      %p84 = por %p82, %p83
      %p85 = scmp.ne.s32.totalorder %s77, %s79
      %p86 = scmp.eq.s32.totalorder %s27, 1
      %p87 = por %p85, %p86
      %p88 = scmp.ne.s32.totalorder %s79, %s80
      %p89 = scmp.eq.s32.totalorder %s27, 0
      %p90 = por %p88, %p89
      %p91 = scmp.ne.s32.totalorder %s79, %s80
      %p92 = scmp.eq.s32.totalorder %s28, 1
      %p93 = por %p91, %p92
      %p95 = scmp.ne.s32.totalorder %s80, %s94
      %p96 = scmp.eq.s32.totalorder %s28, 0
      %p97 = por %p95, %p96
      %s99 = sadd.s32 %s98, 1
      %p102 = scmp.eq.s32.totalorder %s22, 1
      %p103 = scmp.ne.s32.totalorder %s98, %s100
      %p104 = scmp.eq.s32.totalorder %s22, 0
      %p105 = por %p103, %p104
      %p106 = scmp.ne.s32.totalorder %s98, %s100
      %p107 = scmp.eq.s32.totalorder %s27, 1
      %p108 = por %p106, %p107
      %p109 = scmp.ne.s32.totalorder %s100, %s101
      %p110 = scmp.eq.s32.totalorder %s27, 0
      %p111 = por %p109, %p110
      %p112 = scmp.ne.s32.totalorder %s100, %s101
      %p113 = scmp.eq.s32.totalorder %s28, 1
      %p114 = por %p112, %p113
      %p116 = scmp.ne.s32.totalorder %s101, %s115
      %p117 = scmp.eq.s32.totalorder %s28, 0
      %p118 = por %p116, %p117
      %s120 = sadd.s32 %s119, 1
      %p123 = scmp.eq.s32.totalorder %s22, 1
      %p124 = scmp.ne.s32.totalorder %s119, %s121
      %p125 = scmp.eq.s32.totalorder %s22, 0
      %p126 = por %p124, %p125
      %p127 = scmp.ne.s32.totalorder %s119, %s121
      %p128 = scmp.eq.s32.totalorder %s27, 1
      %p129 = por %p127, %p128
      %p130 = scmp.ne.s32.totalorder %s121, %s122
      %p131 = scmp.eq.s32.totalorder %s27, 0
      %p132 = por %p130, %p131
      %p133 = scmp.ne.s32.totalorder %s121, %s122
      %p134 = scmp.eq.s32.totalorder %s28, 1
      %p135 = por %p133, %p134
      %p137 = scmp.ne.s32.totalorder %s122, %s136
      %p138 = scmp.eq.s32.totalorder %s28, 0
      %p139 = por %p137, %p138
      %s141 = sadd.s32 %s140, 1
      %p144 = scmp.eq.s32.totalorder %s22, 1
      %p145 = scmp.ne.s32.totalorder %s140, %s142
      %p146 = scmp.eq.s32.totalorder %s22, 0
      %p147 = por %p145, %p146
      %p148 = scmp.ne.s32.totalorder %s140, %s142
      %p149 = scmp.eq.s32.totalorder %s27, 1
      %p150 = por %p148, %p149
      %p151 = scmp.ne.s32.totalorder %s142, %s143
      %p152 = scmp.eq.s32.totalorder %s27, 0
      %p153 = por %p151, %p152
      %p154 = scmp.ne.s32.totalorder %s142, %s143
      %p155 = scmp.eq.s32.totalorder %s28, 1
      %p156 = por %p154, %p155
      %p158 = scmp.ne.s32.totalorder %s143, %s157
      %p159 = scmp.eq.s32.totalorder %s28, 0
      %p160 = por %p158, %p159
      %s162 = sadd.s32 %s161, 1
      %p165 = scmp.eq.s32.totalorder %s22, 1
      %p166 = scmp.ne.s32.totalorder %s161, %s163
      %p167 = scmp.eq.s32.totalorder %s22, 0
      %p168 = por %p166, %p167
      %p169 = scmp.ne.s32.totalorder %s161, %s163
      %p170 = scmp.eq.s32.totalorder %s27, 1
      %p171 = por %p169, %p170
      %p172 = scmp.ne.s32.totalorder %s163, %s164
      %p173 = scmp.eq.s32.totalorder %s27, 0
      %p174 = por %p172, %p173
      %p175 = scmp.ne.s32.totalorder %s163, %s164
      %p176 = scmp.eq.s32.totalorder %s28, 1
      %p177 = por %p175, %p176
      %p179 = scmp.ne.s32.totalorder %s164, %s178
      %p180 = scmp.eq.s32.totalorder %s28, 0
      %p181 = por %p179, %p180
      %s182 = ssub.s32 %s22, %s29
      %p183 = scmp.eq.s32.totalorder %s182, 0
      %s185 = sadd.s32 %s184, 1
      %s186 = scalar_select %p183, %s184, %s185
      %p189 = pneg %p183
      %p190 = scmp.eq.s32.totalorder %s22, 1
      %p191 = por %p189, %p190
      %p192 = scmp.ne.s32.totalorder %s184, %s187
      %p193 = scmp.eq.s32.totalorder %s22, 0
      %p194 = por %p192, %p193
      %p195 = scmp.ne.s32.totalorder %s184, %s187
      %p196 = scmp.eq.s32.totalorder %s27, 1
      %p197 = por %p195, %p196
      %p198 = scmp.ne.s32.totalorder %s187, %s188
      %p199 = scmp.eq.s32.totalorder %s27, 0
      %p200 = por %p198, %p199
      %p201 = scmp.ne.s32.totalorder %s187, %s188
      %p202 = scmp.eq.s32.totalorder %s28, 1
      %p203 = por %p201, %p202
      %p205 = scmp.ne.s32.totalorder %s188, %s204
      %p206 = scmp.eq.s32.totalorder %s28, 0
      %p207 = por %p205, %p206
      %p208 = scmp.le.s32.totalorder 1, %s22
      %p209 = scmp.lt.s32.totalorder %s22, 3
      %p210 = pnand %p208, %p209
      %p211 = pneg %p210
      // Predicated region
      $region9: #{mlp_forward.1} parent=5 // pred_check
        _
      $region10: #{mlp_forward.1} parent=5 // pred_check_branch
        %213 = sbr.rel (%p210) target = $region12
      $region11: #{mlp_forward.1} parent=5 // pred_region
        %s214 = ssub.s32 %s22, 1
        // Predicated region
        $region13: #{mlp_forward.1} parent=11 // pred_check
          %p215 = pneg %p69
        $region14: #{mlp_forward.1} parent=11 // pred_check_branch
          %217 = sbr.rel (%p215) target = $region16
        $region15: #{mlp_forward.1} parent=11 // pred_region
          %219 = vsyncadd [#allocation6], 0
          %s220 = sshll.u32 %s1, 4
          %s221 = int_to_ptr.hbm [resolvable:$true] %s220
          %s222 = sshll.u32 [#allocation5], 4
          %s223 = int_to_ptr.vmem [resolvable:$true] %s222
          %228 = dma.hbm_to_vmem [thread:$0]  %s221, 49152, %s223, [#allocation6], 128, 128, 8
        $region16: #{mlp_forward.1} parent=11 // pred_fallthru
          _
        // Predicated region
        $region17: #{mlp_forward.1} parent=11 // pred_check
          %p229 = pneg %p90
        $region18: #{mlp_forward.1} parent=11 // pred_check_branch
          %231 = sbr.rel (%p229) target = $region20
        $region19: #{mlp_forward.1} parent=11 // pred_region
          %233 = vsyncadd [#allocation6], 0
          %s235 = sshll.u32 %s2, 4
          %s236 = int_to_ptr.hbm [resolvable:$true] %s235
          %s237 = sshll.u32 [#allocation7], 4
          %s238 = int_to_ptr.vmem [resolvable:$true] %s237
          %240 = dma.hbm_to_vmem [thread:$0]  %s236, 32, %s238, [#allocation6]
        $region20: #{mlp_forward.1} parent=11 // pred_fallthru
          _
        // Predicated region
        $region21: #{mlp_forward.1} parent=11 // pred_check
          %p241 = pneg %p111
        $region22: #{mlp_forward.1} parent=11 // pred_check_branch
          %243 = sbr.rel (%p241) target = $region24
        $region23: #{mlp_forward.1} parent=11 // pred_region
          %245 = vsyncadd [#allocation9], 0
          %s246 = sshll.u32 %s3, 4
          %s247 = int_to_ptr.hbm [resolvable:$true] %s246
          %s248 = sshll.u32 [#allocation8], 4
          %s249 = int_to_ptr.vmem [resolvable:$true] %s248
          %254 = dma.hbm_to_vmem [thread:$0]  %s247, 2048, %s249, [#allocation9], 64, 64, 4
        $region24: #{mlp_forward.1} parent=11 // pred_fallthru
          _
        // Predicated region
        $region25: #{mlp_forward.1} parent=11 // pred_check
          %p255 = pneg %p132
        $region26: #{mlp_forward.1} parent=11 // pred_check_branch
          %257 = sbr.rel (%p255) target = $region28
        $region27: #{mlp_forward.1} parent=11 // pred_region
          %259 = vsyncadd [#allocation9], 0
          %s261 = sshll.u32 %s4, 4
          %s262 = int_to_ptr.hbm [resolvable:$true] %s261
          %s263 = sshll.u32 [#allocation10], 4
          %s264 = int_to_ptr.vmem [resolvable:$true] %s263
          %266 = dma.hbm_to_vmem [thread:$0]  %s262, 16, %s264, [#allocation9]
        $region28: #{mlp_forward.1} parent=11 // pred_fallthru
          _
        // Predicated region
        $region29: #{mlp_forward.1} parent=11 // pred_check
          %p267 = pneg %p153
        $region30: #{mlp_forward.1} parent=11 // pred_check_branch
          %269 = sbr.rel (%p267) target = $region32
        $region31: #{mlp_forward.1} parent=11 // pred_region
          %271 = vsyncadd [#allocation12], 0
          %s272 = sshll.u32 %s5, 4
          %s273 = int_to_ptr.hbm [resolvable:$true] %s272
          %s274 = sshll.u32 [#allocation11], 4
          %s275 = int_to_ptr.vmem [resolvable:$true] %s274
          %280 = dma.hbm_to_vmem [thread:$0]  %s273, 1024, %s275, [#allocation12], 64, 64, 4
        $region32: #{mlp_forward.1} parent=11 // pred_fallthru
          _
        // Predicated region
        $region33: #{mlp_forward.1} parent=11 // pred_check
          %p281 = pneg %p174
        $region34: #{mlp_forward.1} parent=11 // pred_check_branch
          %283 = sbr.rel (%p281) target = $region36
        $region35: #{mlp_forward.1} parent=11 // pred_region
          %285 = vsyncadd [#allocation12], 0
          %s287 = sshll.u32 %s6, 4
          %s288 = int_to_ptr.hbm [resolvable:$true] %s287
          %s289 = sshll.u32 [#allocation13], 4
          %s290 = int_to_ptr.vmem [resolvable:$true] %s289
          %292 = dma.hbm_to_vmem [thread:$0]  %s288, 16, %s290, [#allocation12]
        $region36: #{mlp_forward.1} parent=11 // pred_fallthru
          _
      $region12: #{mlp_forward.1} parent=5 // pred_fallthru
        _
      %p293 = scmp.lt.s32.totalorder %s22, 2
      // Predicated region
      $region37: #{mlp_forward.1} parent=5 // pred_check
        %p294 = pneg %p293
      $region38: #{mlp_forward.1} parent=5 // pred_check_branch
        %296 = sbr.rel (%p294) target = $region40
      $region39: #{mlp_forward.1} parent=5 // pred_region
        // Predicated region
        $region41: #{mlp_forward.1} parent=39 // pred_check
          %p297 = pneg %p42
        $region42: #{mlp_forward.1} parent=39 // pred_check_branch
          %299 = sbr.rel (%p297) target = $region44
        $region43: #{mlp_forward.1} parent=39 // pred_region
          %s300 = sand.u32 %s32, 1
          %s301 = scalar_lea.sflag [#allocation3], %s300
          %s302 = sand.u32 %s32, 1
          %s303 = smul.addr %s302, 192
          %s304 = scalar_lea.vmem [#allocation2], %s303
          %306 = vsyncadd %s301, 0
          %s307 = smul.addr %s22, 24
          %s308 = smul.addr %s307, 8
          %s309 = scalar_lea.hbm %s0, %s308
          %s311 = sshll.u32 %s309, 4
          %s312 = int_to_ptr.hbm [resolvable:$true] %s311
          %s313 = sshll.u32 %s304, 4
          %s314 = int_to_ptr.vmem [resolvable:$true] %s313
          %316 = dma.hbm_to_vmem [thread:$0]  %s312, 3072, %s314, %s301
        $region44: #{mlp_forward.1} parent=39 // pred_fallthru
          _
      $region40: #{mlp_forward.1} parent=5 // pred_fallthru
        _
      %p317 = scmp.le.s32.totalorder 1, %s22
      %p318 = scmp.lt.s32.totalorder %s22, 3
      %p319 = pnand %p317, %p318
      %p320 = pneg %p319
      // Predicated region
      $region45: #{mlp_forward.1} parent=5 // pred_check
        _
      $region46: #{mlp_forward.1} parent=5 // pred_check_branch
        %322 = sbr.rel (%p319) target = $region48
      $region47: #{mlp_forward.1} parent=5 // pred_region
        %s323 = ssub.s32 %s22, 1
        %s324 = sand.u32 %s35, 1
        %s325 = scalar_lea.sflag [#allocation3], %s324
        %s326 = sand.u32 %s35, 1
        %s327 = smul.addr %s326, 192
        %s328 = scalar_lea.vmem [#allocation2], %s327
        // Predicated region
        $region49: #{mlp_forward.1} parent=47 // pred_check
          %p329 = pneg %p48
        $region50: #{mlp_forward.1} parent=47 // pred_check_branch
          %331 = sbr.rel (%p329) target = $region52
        $region51: #{mlp_forward.1} parent=47 // pred_region
          %333 = dma.done %s325, 3072
        $region52: #{mlp_forward.1} parent=47 // pred_fallthru
          _
        // Predicated region
        $region53: #{mlp_forward.1} parent=47 // pred_check
          %p334 = pneg %p69
        $region54: #{mlp_forward.1} parent=47 // pred_check_branch
          %336 = sbr.rel (%p334) target = $region56
        $region55: #{mlp_forward.1} parent=47 // pred_region
          %338 = dma.done [#allocation6], 49152
        $region56: #{mlp_forward.1} parent=47 // pred_fallthru
          _
        // Predicated region
        $region57: #{mlp_forward.1} parent=47 // pred_check
          %p339 = pneg %p90
        $region58: #{mlp_forward.1} parent=47 // pred_check_branch
          %341 = sbr.rel (%p339) target = $region60
        $region59: #{mlp_forward.1} parent=47 // pred_region
          %343 = dma.done [#allocation6], 32
        $region60: #{mlp_forward.1} parent=47 // pred_fallthru
          _
        // Predicated region
        $region61: #{mlp_forward.1} parent=47 // pred_check
          %p344 = pneg %p111
        $region62: #{mlp_forward.1} parent=47 // pred_check_branch
          %346 = sbr.rel (%p344) target = $region64
        $region63: #{mlp_forward.1} parent=47 // pred_region
          %348 = dma.done [#allocation9], 2048
        $region64: #{mlp_forward.1} parent=47 // pred_fallthru
          _
        // Predicated region
        $region65: #{mlp_forward.1} parent=47 // pred_check
          %p349 = pneg %p132
        $region66: #{mlp_forward.1} parent=47 // pred_check_branch
          %351 = sbr.rel (%p349) target = $region68
        $region67: #{mlp_forward.1} parent=47 // pred_region
          %353 = dma.done [#allocation9], 16
        $region68: #{mlp_forward.1} parent=47 // pred_fallthru
          _
        // Predicated region
        $region69: #{mlp_forward.1} parent=47 // pred_check
          %p354 = pneg %p153
        $region70: #{mlp_forward.1} parent=47 // pred_check_branch
          %356 = sbr.rel (%p354) target = $region72
        $region71: #{mlp_forward.1} parent=47 // pred_region
          %358 = dma.done [#allocation12], 1024
        $region72: #{mlp_forward.1} parent=47 // pred_fallthru
          _
        // Predicated region
        $region73: #{mlp_forward.1} parent=47 // pred_check
          %p359 = pneg %p174
        $region74: #{mlp_forward.1} parent=47 // pred_check_branch
          %361 = sbr.rel (%p359) target = $region76
        $region75: #{mlp_forward.1} parent=47 // pred_region
          %363 = dma.done [#allocation12], 16
        $region76: #{mlp_forward.1} parent=47 // pred_fallthru
          _
        %s364 = sand.u32 %s35, 1
        %s365 = scalar_lea.sflag [#allocation3], %s364
        %s366 = sand.u32 %s35, 1
        %s367 = smul.addr %s366, 192
        %s368 = scalar_lea.vmem [#allocation2], %s367
        %p369 = pneg %p48
        %p370 = pneg %p45
        %p371 = pneg %p69
        %p372 = pneg %p66
        %p373 = pneg %p90
        %p374 = pneg %p87
        %p375 = pneg %p111
        %p376 = pneg %p108
        %p377 = pneg %p132
        %p378 = pneg %p129
        %p379 = pneg %p153
        %p380 = pneg %p150
        %p381 = pneg %p174
        %p382 = pneg %p171
        %p383 = pneg %p200
        %p384 = pneg %p197
        %s385 = sand.u32 %s187, 1
        %s386 = scalar_lea.sflag [#allocation4], %s385
        %s387 = sand.u32 %s187, 1
        %s388 = smul.addr %s387, 8
        %s389 = scalar_lea.vmem [#allocation14], %s388
        %v390 = vld [vmem:[%s328] sm:$0xff]
        %v391 = vld [vmem:[%s328 + $0x8] sm:$0xff]
        %v392 = vld [vmem:[%s328 + $0x10] sm:$0xff]
        %v393 = vld [vmem:[%s328 + $0x18] sm:$0xff]
        %v394 = vld [vmem:[%s328 + $0x20] sm:$0xff]
        %v395 = vld [vmem:[%s328 + $0x28] sm:$0xff]
        %v396 = vld [vmem:[%s328 + $0x30] sm:$0xff]
        %v397 = vld [vmem:[%s328 + $0x38] sm:$0xff]
        %v398 = vld [vmem:[%s328 + $0x40] sm:$0xff]
        %v399 = vld [vmem:[%s328 + $0x48] sm:$0xff]
        %v400 = vld [vmem:[%s328 + $0x50] sm:$0xff]
        %v401 = vld [vmem:[%s328 + $0x58] sm:$0xff]
        %v402 = vld [vmem:[%s328 + $0x60] sm:$0xff]
        %v403 = vld [vmem:[%s328 + $0x68] sm:$0xff]
        %v404 = vld [vmem:[%s328 + $0x70] sm:$0xff]
        %v405 = vld [vmem:[%s328 + $0x78] sm:$0xff]
        %v406 = vld [vmem:[%s328 + $0x80] sm:$0xff]
        %v407 = vld [vmem:[%s328 + $0x88] sm:$0xff]
        %v408 = vld [vmem:[%s328 + $0x90] sm:$0xff]
        %v409 = vld [vmem:[%s328 + $0x98] sm:$0xff]
        %v410 = vld [vmem:[%s328 + $0xa0] sm:$0xff]
        %v411 = vld [vmem:[%s328 + $0xa8] sm:$0xff]
        %v412 = vld [vmem:[%s328 + $0xb0] sm:$0xff]
        %v413 = vld [vmem:[%s328 + $0xb8] sm:$0xff]
        %v414 = vpack.c.bf16 %v390, %v390
        %v415 = vpack.c.bf16 %v391, %v391
        %v416 = vpack.c.bf16 %v392, %v392
        %v417 = vpack.c.bf16 %v393, %v393
        %v418 = vpack.c.bf16 %v394, %v394
        %v419 = vpack.c.bf16 %v395, %v395
        %v420 = vpack.c.bf16 %v396, %v396
        %v421 = vpack.c.bf16 %v397, %v397
        %v422 = vpack.c.bf16 %v398, %v398
        %v423 = vpack.c.bf16 %v399, %v399
        %v424 = vpack.c.bf16 %v400, %v400
        %v425 = vpack.c.bf16 %v401, %v401
        %v426 = vpack.c.bf16 %v402, %v402
        %v427 = vpack.c.bf16 %v403, %v403
        %v428 = vpack.c.bf16 %v404, %v404
        %v429 = vpack.c.bf16 %v405, %v405
        %v430 = vpack.c.bf16 %v406, %v406
        %v431 = vpack.c.bf16 %v407, %v407
        %v432 = vpack.c.bf16 %v408, %v408
        %v433 = vpack.c.bf16 %v409, %v409
        %v434 = vpack.c.bf16 %v410, %v410
        %v435 = vpack.c.bf16 %v411, %v411
        %v436 = vpack.c.bf16 %v412, %v412
        %v437 = vpack.c.bf16 %v413, %v413
        %v438 = vld [vmem:[#allocation5] sm:$0xff]
        %v439 = vld [vmem:[#allocation5 + $0x8] sm:$0xff]
        %v440 = vld [vmem:[#allocation5 + $0x10] sm:$0xff]
        %v441 = vld [vmem:[#allocation5 + $0x18] sm:$0xff]
        %v442 = vld [vmem:[#allocation5 + $0x20] sm:$0xff]
        %v443 = vld [vmem:[#allocation5 + $0x28] sm:$0xff]
        %v444 = vld [vmem:[#allocation5 + $0x30] sm:$0xff]
        %v445 = vld [vmem:[#allocation5 + $0x38] sm:$0xff]
        %v446 = vld [vmem:[#allocation5 + $0x40] sm:$0xff]
        %v447 = vld [vmem:[#allocation5 + $0x48] sm:$0xff]
        %v448 = vld [vmem:[#allocation5 + $0x50] sm:$0xff]
        %v449 = vld [vmem:[#allocation5 + $0x58] sm:$0xff]
        %v450 = vld [vmem:[#allocation5 + $0x60] sm:$0xff]
        %v451 = vld [vmem:[#allocation5 + $0x68] sm:$0xff]
        %v452 = vld [vmem:[#allocation5 + $0x70] sm:$0xff]
        %v453 = vld [vmem:[#allocation5 + $0x78] sm:$0xff]
        %v454 = vld [vmem:[#allocation5 + $0x80] sm:$0xff]
        %v455 = vld [vmem:[#allocation5 + $0x88] sm:$0xff]
        %v456 = vld [vmem:[#allocation5 + $0x90] sm:$0xff]
        %v457 = vld [vmem:[#allocation5 + $0x98] sm:$0xff]
        %v458 = vld [vmem:[#allocation5 + $0xa0] sm:$0xff]
        %v459 = vld [vmem:[#allocation5 + $0xa8] sm:$0xff]
        %v460 = vld [vmem:[#allocation5 + $0xb0] sm:$0xff]
        %v461 = vld [vmem:[#allocation5 + $0xb8] sm:$0xff]
        %v462 = vld [vmem:[#allocation5 + $0xc0] sm:$0xff]
        %v463 = vld [vmem:[#allocation5 + $0xc8] sm:$0xff]
        %v464 = vld [vmem:[#allocation5 + $0xd0] sm:$0xff]
        %v465 = vld [vmem:[#allocation5 + $0xd8] sm:$0xff]
        %v466 = vld [vmem:[#allocation5 + $0xe0] sm:$0xff]
        %v467 = vld [vmem:[#allocation5 + $0xe8] sm:$0xff]
        %v468 = vld [vmem:[#allocation5 + $0xf0] sm:$0xff]
        %v469 = vld [vmem:[#allocation5 + $0xf8] sm:$0xff]
        %v470 = vld [vmem:[#allocation5 + $0x100] sm:$0xff]
        %v471 = vld [vmem:[#allocation5 + $0x108] sm:$0xff]
        %v472 = vld [vmem:[#allocation5 + $0x110] sm:$0xff]
        %v473 = vld [vmem:[#allocation5 + $0x118] sm:$0xff]
        %v474 = vld [vmem:[#allocation5 + $0x120] sm:$0xff]
        %v475 = vld [vmem:[#allocation5 + $0x128] sm:$0xff]
        %v476 = vld [vmem:[#allocation5 + $0x130] sm:$0xff]
        %v477 = vld [vmem:[#allocation5 + $0x138] sm:$0xff]
        %v478 = vld [vmem:[#allocation5 + $0x140] sm:$0xff]
        %v479 = vld [vmem:[#allocation5 + $0x148] sm:$0xff]
        %v480 = vld [vmem:[#allocation5 + $0x150] sm:$0xff]
        %v481 = vld [vmem:[#allocation5 + $0x158] sm:$0xff]
        %v482 = vld [vmem:[#allocation5 + $0x160] sm:$0xff]
        %v483 = vld [vmem:[#allocation5 + $0x168] sm:$0xff]
        %v484 = vld [vmem:[#allocation5 + $0x170] sm:$0xff]
        %v485 = vld [vmem:[#allocation5 + $0x178] sm:$0xff]
        %v486 = vld [vmem:[#allocation5 + $0x180] sm:$0xff]
        %v487 = vld [vmem:[#allocation5 + $0x188] sm:$0xff]
        %v488 = vld [vmem:[#allocation5 + $0x190] sm:$0xff]
        %v489 = vld [vmem:[#allocation5 + $0x198] sm:$0xff]
        %v490 = vld [vmem:[#allocation5 + $0x1a0] sm:$0xff]
        %v491 = vld [vmem:[#allocation5 + $0x1a8] sm:$0xff]
        %v492 = vld [vmem:[#allocation5 + $0x1b0] sm:$0xff]
        %v493 = vld [vmem:[#allocation5 + $0x1b8] sm:$0xff]
        %v494 = vld [vmem:[#allocation5 + $0x1c0] sm:$0xff]
        %v495 = vld [vmem:[#allocation5 + $0x1c8] sm:$0xff]
        %v496 = vld [vmem:[#allocation5 + $0x1d0] sm:$0xff]
        %v497 = vld [vmem:[#allocation5 + $0x1d8] sm:$0xff]
        %v498 = vld [vmem:[#allocation5 + $0x1e0] sm:$0xff]
        %v499 = vld [vmem:[#allocation5 + $0x1e8] sm:$0xff]
        %v500 = vld [vmem:[#allocation5 + $0x1f0] sm:$0xff]
        %v501 = vld [vmem:[#allocation5 + $0x1f8] sm:$0xff]
        %v502 = vld [vmem:[#allocation5 + $0x200] sm:$0xff]
        %v503 = vld [vmem:[#allocation5 + $0x208] sm:$0xff]
        %v504 = vld [vmem:[#allocation5 + $0x210] sm:$0xff]
        %v505 = vld [vmem:[#allocation5 + $0x218] sm:$0xff]
        %v506 = vld [vmem:[#allocation5 + $0x220] sm:$0xff]
        %v507 = vld [vmem:[#allocation5 + $0x228] sm:$0xff]
        %v508 = vld [vmem:[#allocation5 + $0x230] sm:$0xff]
        %v509 = vld [vmem:[#allocation5 + $0x238] sm:$0xff]
        %v510 = vld [vmem:[#allocation5 + $0x240] sm:$0xff]
        %v511 = vld [vmem:[#allocation5 + $0x248] sm:$0xff]
        %v512 = vld [vmem:[#allocation5 + $0x250] sm:$0xff]
        %v513 = vld [vmem:[#allocation5 + $0x258] sm:$0xff]
        %v514 = vld [vmem:[#allocation5 + $0x260] sm:$0xff]
        %v515 = vld [vmem:[#allocation5 + $0x268] sm:$0xff]
        %v516 = vld [vmem:[#allocation5 + $0x270] sm:$0xff]
        %v517 = vld [vmem:[#allocation5 + $0x278] sm:$0xff]
        %v518 = vld [vmem:[#allocation5 + $0x280] sm:$0xff]
        %v519 = vld [vmem:[#allocation5 + $0x288] sm:$0xff]
        %v520 = vld [vmem:[#allocation5 + $0x290] sm:$0xff]
        %v521 = vld [vmem:[#allocation5 + $0x298] sm:$0xff]
        %v522 = vld [vmem:[#allocation5 + $0x2a0] sm:$0xff]
        %v523 = vld [vmem:[#allocation5 + $0x2a8] sm:$0xff]
        %v524 = vld [vmem:[#allocation5 + $0x2b0] sm:$0xff]
        %v525 = vld [vmem:[#allocation5 + $0x2b8] sm:$0xff]
        %v526 = vld [vmem:[#allocation5 + $0x2c0] sm:$0xff]
        %v527 = vld [vmem:[#allocation5 + $0x2c8] sm:$0xff]
        %v528 = vld [vmem:[#allocation5 + $0x2d0] sm:$0xff]
        %v529 = vld [vmem:[#allocation5 + $0x2d8] sm:$0xff]
        %v530 = vld [vmem:[#allocation5 + $0x2e0] sm:$0xff]
        %v531 = vld [vmem:[#allocation5 + $0x2e8] sm:$0xff]
        %v532 = vld [vmem:[#allocation5 + $0x2f0] sm:$0xff]
        %v533 = vld [vmem:[#allocation5 + $0x2f8] sm:$0xff]
        %v534 = vld [vmem:[#allocation5 + $0x300] sm:$0xff]
        %v535 = vld [vmem:[#allocation5 + $0x308] sm:$0xff]
        %v536 = vld [vmem:[#allocation5 + $0x310] sm:$0xff]
        %v537 = vld [vmem:[#allocation5 + $0x318] sm:$0xff]
        %v538 = vld [vmem:[#allocation5 + $0x320] sm:$0xff]
        %v539 = vld [vmem:[#allocation5 + $0x328] sm:$0xff]
        %v540 = vld [vmem:[#allocation5 + $0x330] sm:$0xff]
        %v541 = vld [vmem:[#allocation5 + $0x338] sm:$0xff]
        %v542 = vld [vmem:[#allocation5 + $0x340] sm:$0xff]
        %v543 = vld [vmem:[#allocation5 + $0x348] sm:$0xff]
        %v544 = vld [vmem:[#allocation5 + $0x350] sm:$0xff]
        %v545 = vld [vmem:[#allocation5 + $0x358] sm:$0xff]
        %v546 = vld [vmem:[#allocation5 + $0x360] sm:$0xff]
        %v547 = vld [vmem:[#allocation5 + $0x368] sm:$0xff]
        %v548 = vld [vmem:[#allocation5 + $0x370] sm:$0xff]
        %v549 = vld [vmem:[#allocation5 + $0x378] sm:$0xff]
        %v550 = vld [vmem:[#allocation5 + $0x380] sm:$0xff]
        %v551 = vld [vmem:[#allocation5 + $0x388] sm:$0xff]
        %v552 = vld [vmem:[#allocation5 + $0x390] sm:$0xff]
        %v553 = vld [vmem:[#allocation5 + $0x398] sm:$0xff]
        %v554 = vld [vmem:[#allocation5 + $0x3a0] sm:$0xff]
        %v555 = vld [vmem:[#allocation5 + $0x3a8] sm:$0xff]
        %v556 = vld [vmem:[#allocation5 + $0x3b0] sm:$0xff]
        %v557 = vld [vmem:[#allocation5 + $0x3b8] sm:$0xff]
        %v558 = vld [vmem:[#allocation5 + $0x3c0] sm:$0xff]
        %v559 = vld [vmem:[#allocation5 + $0x3c8] sm:$0xff]
        %v560 = vld [vmem:[#allocation5 + $0x3d0] sm:$0xff]
        %v561 = vld [vmem:[#allocation5 + $0x3d8] sm:$0xff]
        %v562 = vld [vmem:[#allocation5 + $0x3e0] sm:$0xff]
        %v563 = vld [vmem:[#allocation5 + $0x3e8] sm:$0xff]
        %v564 = vld [vmem:[#allocation5 + $0x3f0] sm:$0xff]
        %v565 = vld [vmem:[#allocation5 + $0x3f8] sm:$0xff]
        %v566 = vld [vmem:[#allocation5 + $0x400] sm:$0xff]
        %v567 = vld [vmem:[#allocation5 + $0x408] sm:$0xff]
        %v568 = vld [vmem:[#allocation5 + $0x410] sm:$0xff]
        %v569 = vld [vmem:[#allocation5 + $0x418] sm:$0xff]
        %v570 = vld [vmem:[#allocation5 + $0x420] sm:$0xff]
        %v571 = vld [vmem:[#allocation5 + $0x428] sm:$0xff]
        %v572 = vld [vmem:[#allocation5 + $0x430] sm:$0xff]
        %v573 = vld [vmem:[#allocation5 + $0x438] sm:$0xff]
        %v574 = vld [vmem:[#allocation5 + $0x440] sm:$0xff]
        %v575 = vld [vmem:[#allocation5 + $0x448] sm:$0xff]
        %v576 = vld [vmem:[#allocation5 + $0x450] sm:$0xff]
        %v577 = vld [vmem:[#allocation5 + $0x458] sm:$0xff]
        %v578 = vld [vmem:[#allocation5 + $0x460] sm:$0xff]
        %v579 = vld [vmem:[#allocation5 + $0x468] sm:$0xff]
        %v580 = vld [vmem:[#allocation5 + $0x470] sm:$0xff]
        %v581 = vld [vmem:[#allocation5 + $0x478] sm:$0xff]
        %v582 = vld [vmem:[#allocation5 + $0x480] sm:$0xff]
        %v583 = vld [vmem:[#allocation5 + $0x488] sm:$0xff]
        %v584 = vld [vmem:[#allocation5 + $0x490] sm:$0xff]
        %v585 = vld [vmem:[#allocation5 + $0x498] sm:$0xff]
        %v586 = vld [vmem:[#allocation5 + $0x4a0] sm:$0xff]
        %v587 = vld [vmem:[#allocation5 + $0x4a8] sm:$0xff]
        %v588 = vld [vmem:[#allocation5 + $0x4b0] sm:$0xff]
        %v589 = vld [vmem:[#allocation5 + $0x4b8] sm:$0xff]
        %v590 = vld [vmem:[#allocation5 + $0x4c0] sm:$0xff]
        %v591 = vld [vmem:[#allocation5 + $0x4c8] sm:$0xff]
        %v592 = vld [vmem:[#allocation5 + $0x4d0] sm:$0xff]
        %v593 = vld [vmem:[#allocation5 + $0x4d8] sm:$0xff]
        %v594 = vld [vmem:[#allocation5 + $0x4e0] sm:$0xff]
        %v595 = vld [vmem:[#allocation5 + $0x4e8] sm:$0xff]
        %v596 = vld [vmem:[#allocation5 + $0x4f0] sm:$0xff]
        %v597 = vld [vmem:[#allocation5 + $0x4f8] sm:$0xff]
        %v598 = vld [vmem:[#allocation5 + $0x500] sm:$0xff]
        %v599 = vld [vmem:[#allocation5 + $0x508] sm:$0xff]
        %v600 = vld [vmem:[#allocation5 + $0x510] sm:$0xff]
        %v601 = vld [vmem:[#allocation5 + $0x518] sm:$0xff]
        %v602 = vld [vmem:[#allocation5 + $0x520] sm:$0xff]
        %v603 = vld [vmem:[#allocation5 + $0x528] sm:$0xff]
        %v604 = vld [vmem:[#allocation5 + $0x530] sm:$0xff]
        %v605 = vld [vmem:[#allocation5 + $0x538] sm:$0xff]
        %v606 = vld [vmem:[#allocation5 + $0x540] sm:$0xff]
        %v607 = vld [vmem:[#allocation5 + $0x548] sm:$0xff]
        %v608 = vld [vmem:[#allocation5 + $0x550] sm:$0xff]
        %v609 = vld [vmem:[#allocation5 + $0x558] sm:$0xff]
        %v610 = vld [vmem:[#allocation5 + $0x560] sm:$0xff]
        %v611 = vld [vmem:[#allocation5 + $0x568] sm:$0xff]
        %v612 = vld [vmem:[#allocation5 + $0x570] sm:$0xff]
        %v613 = vld [vmem:[#allocation5 + $0x578] sm:$0xff]
        %v614 = vld [vmem:[#allocation5 + $0x580] sm:$0xff]
        %v615 = vld [vmem:[#allocation5 + $0x588] sm:$0xff]
        %v616 = vld [vmem:[#allocation5 + $0x590] sm:$0xff]
        %v617 = vld [vmem:[#allocation5 + $0x598] sm:$0xff]
        %v618 = vld [vmem:[#allocation5 + $0x5a0] sm:$0xff]
        %v619 = vld [vmem:[#allocation5 + $0x5a8] sm:$0xff]
        %v620 = vld [vmem:[#allocation5 + $0x5b0] sm:$0xff]
        %v621 = vld [vmem:[#allocation5 + $0x5b8] sm:$0xff]
        %v622 = vld [vmem:[#allocation5 + $0x5c0] sm:$0xff]
        %v623 = vld [vmem:[#allocation5 + $0x5c8] sm:$0xff]
        %v624 = vld [vmem:[#allocation5 + $0x5d0] sm:$0xff]
        %v625 = vld [vmem:[#allocation5 + $0x5d8] sm:$0xff]
        %v626 = vld [vmem:[#allocation5 + $0x5e0] sm:$0xff]
        %v627 = vld [vmem:[#allocation5 + $0x5e8] sm:$0xff]
        %v628 = vld [vmem:[#allocation5 + $0x5f0] sm:$0xff]
        %v629 = vld [vmem:[#allocation5 + $0x5f8] sm:$0xff]
        %v630 = vld [vmem:[#allocation5 + $0x600] sm:$0xff]
        %v631 = vld [vmem:[#allocation5 + $0x608] sm:$0xff]
        %v632 = vld [vmem:[#allocation5 + $0x610] sm:$0xff]
        %v633 = vld [vmem:[#allocation5 + $0x618] sm:$0xff]
        %v634 = vld [vmem:[#allocation5 + $0x620] sm:$0xff]
        %v635 = vld [vmem:[#allocation5 + $0x628] sm:$0xff]
        %v636 = vld [vmem:[#allocation5 + $0x630] sm:$0xff]
        %v637 = vld [vmem:[#allocation5 + $0x638] sm:$0xff]
        %v638 = vld [vmem:[#allocation5 + $0x640] sm:$0xff]
        %v639 = vld [vmem:[#allocation5 + $0x648] sm:$0xff]
        %v640 = vld [vmem:[#allocation5 + $0x650] sm:$0xff]
        %v641 = vld [vmem:[#allocation5 + $0x658] sm:$0xff]
        %v642 = vld [vmem:[#allocation5 + $0x660] sm:$0xff]
        %v643 = vld [vmem:[#allocation5 + $0x668] sm:$0xff]
        %v644 = vld [vmem:[#allocation5 + $0x670] sm:$0xff]
        %v645 = vld [vmem:[#allocation5 + $0x678] sm:$0xff]
        %v646 = vld [vmem:[#allocation5 + $0x680] sm:$0xff]
        %v647 = vld [vmem:[#allocation5 + $0x688] sm:$0xff]
        %v648 = vld [vmem:[#allocation5 + $0x690] sm:$0xff]
        %v649 = vld [vmem:[#allocation5 + $0x698] sm:$0xff]
        %v650 = vld [vmem:[#allocation5 + $0x6a0] sm:$0xff]
        %v651 = vld [vmem:[#allocation5 + $0x6a8] sm:$0xff]
        %v652 = vld [vmem:[#allocation5 + $0x6b0] sm:$0xff]
        %v653 = vld [vmem:[#allocation5 + $0x6b8] sm:$0xff]
        %v654 = vld [vmem:[#allocation5 + $0x6c0] sm:$0xff]
        %v655 = vld [vmem:[#allocation5 + $0x6c8] sm:$0xff]
        %v656 = vld [vmem:[#allocation5 + $0x6d0] sm:$0xff]
        %v657 = vld [vmem:[#allocation5 + $0x6d8] sm:$0xff]
        %v658 = vld [vmem:[#allocation5 + $0x6e0] sm:$0xff]
        %v659 = vld [vmem:[#allocation5 + $0x6e8] sm:$0xff]
        %v660 = vld [vmem:[#allocation5 + $0x6f0] sm:$0xff]
        %v661 = vld [vmem:[#allocation5 + $0x6f8] sm:$0xff]
        %v662 = vld [vmem:[#allocation5 + $0x700] sm:$0xff]
        %v663 = vld [vmem:[#allocation5 + $0x708] sm:$0xff]
        %v664 = vld [vmem:[#allocation5 + $0x710] sm:$0xff]
        %v665 = vld [vmem:[#allocation5 + $0x718] sm:$0xff]
        %v666 = vld [vmem:[#allocation5 + $0x720] sm:$0xff]
        %v667 = vld [vmem:[#allocation5 + $0x728] sm:$0xff]
        %v668 = vld [vmem:[#allocation5 + $0x730] sm:$0xff]
        %v669 = vld [vmem:[#allocation5 + $0x738] sm:$0xff]
        %v670 = vld [vmem:[#allocation5 + $0x740] sm:$0xff]
        %v671 = vld [vmem:[#allocation5 + $0x748] sm:$0xff]
        %v672 = vld [vmem:[#allocation5 + $0x750] sm:$0xff]
        %v673 = vld [vmem:[#allocation5 + $0x758] sm:$0xff]
        %v674 = vld [vmem:[#allocation5 + $0x760] sm:$0xff]
        %v675 = vld [vmem:[#allocation5 + $0x768] sm:$0xff]
        %v676 = vld [vmem:[#allocation5 + $0x770] sm:$0xff]
        %v677 = vld [vmem:[#allocation5 + $0x778] sm:$0xff]
        %v678 = vld [vmem:[#allocation5 + $0x780] sm:$0xff]
        %v679 = vld [vmem:[#allocation5 + $0x788] sm:$0xff]
        %v680 = vld [vmem:[#allocation5 + $0x790] sm:$0xff]
        %v681 = vld [vmem:[#allocation5 + $0x798] sm:$0xff]
        %v682 = vld [vmem:[#allocation5 + $0x7a0] sm:$0xff]
        %v683 = vld [vmem:[#allocation5 + $0x7a8] sm:$0xff]
        %v684 = vld [vmem:[#allocation5 + $0x7b0] sm:$0xff]
        %v685 = vld [vmem:[#allocation5 + $0x7b8] sm:$0xff]
        %v686 = vld [vmem:[#allocation5 + $0x7c0] sm:$0xff]
        %v687 = vld [vmem:[#allocation5 + $0x7c8] sm:$0xff]
        %v688 = vld [vmem:[#allocation5 + $0x7d0] sm:$0xff]
        %v689 = vld [vmem:[#allocation5 + $0x7d8] sm:$0xff]
        %v690 = vld [vmem:[#allocation5 + $0x7e0] sm:$0xff]
        %v691 = vld [vmem:[#allocation5 + $0x7e8] sm:$0xff]
        %v692 = vld [vmem:[#allocation5 + $0x7f0] sm:$0xff]
        %v693 = vld [vmem:[#allocation5 + $0x7f8] sm:$0xff]
        %v694 = vld [vmem:[#allocation5 + $0x800] sm:$0xff]
        %v695 = vld [vmem:[#allocation5 + $0x808] sm:$0xff]
        %v696 = vld [vmem:[#allocation5 + $0x810] sm:$0xff]
        %v697 = vld [vmem:[#allocation5 + $0x818] sm:$0xff]
        %v698 = vld [vmem:[#allocation5 + $0x820] sm:$0xff]
        %v699 = vld [vmem:[#allocation5 + $0x828] sm:$0xff]
        %v700 = vld [vmem:[#allocation5 + $0x830] sm:$0xff]
        %v701 = vld [vmem:[#allocation5 + $0x838] sm:$0xff]
        %v702 = vld [vmem:[#allocation5 + $0x840] sm:$0xff]
        %v703 = vld [vmem:[#allocation5 + $0x848] sm:$0xff]
        %v704 = vld [vmem:[#allocation5 + $0x850] sm:$0xff]
        %v705 = vld [vmem:[#allocation5 + $0x858] sm:$0xff]
        %v706 = vld [vmem:[#allocation5 + $0x860] sm:$0xff]
        %v707 = vld [vmem:[#allocation5 + $0x868] sm:$0xff]
        %v708 = vld [vmem:[#allocation5 + $0x870] sm:$0xff]
        %v709 = vld [vmem:[#allocation5 + $0x878] sm:$0xff]
        %v710 = vld [vmem:[#allocation5 + $0x880] sm:$0xff]
        %v711 = vld [vmem:[#allocation5 + $0x888] sm:$0xff]
        %v712 = vld [vmem:[#allocation5 + $0x890] sm:$0xff]
        %v713 = vld [vmem:[#allocation5 + $0x898] sm:$0xff]
        %v714 = vld [vmem:[#allocation5 + $0x8a0] sm:$0xff]
        %v715 = vld [vmem:[#allocation5 + $0x8a8] sm:$0xff]
        %v716 = vld [vmem:[#allocation5 + $0x8b0] sm:$0xff]
        %v717 = vld [vmem:[#allocation5 + $0x8b8] sm:$0xff]
        %v718 = vld [vmem:[#allocation5 + $0x8c0] sm:$0xff]
        %v719 = vld [vmem:[#allocation5 + $0x8c8] sm:$0xff]
        %v720 = vld [vmem:[#allocation5 + $0x8d0] sm:$0xff]
        %v721 = vld [vmem:[#allocation5 + $0x8d8] sm:$0xff]
        %v722 = vld [vmem:[#allocation5 + $0x8e0] sm:$0xff]
        %v723 = vld [vmem:[#allocation5 + $0x8e8] sm:$0xff]
        %v724 = vld [vmem:[#allocation5 + $0x8f0] sm:$0xff]
        %v725 = vld [vmem:[#allocation5 + $0x8f8] sm:$0xff]
        %v726 = vld [vmem:[#allocation5 + $0x900] sm:$0xff]
        %v727 = vld [vmem:[#allocation5 + $0x908] sm:$0xff]
        %v728 = vld [vmem:[#allocation5 + $0x910] sm:$0xff]
        %v729 = vld [vmem:[#allocation5 + $0x918] sm:$0xff]
        %v730 = vld [vmem:[#allocation5 + $0x920] sm:$0xff]
        %v731 = vld [vmem:[#allocation5 + $0x928] sm:$0xff]
        %v732 = vld [vmem:[#allocation5 + $0x930] sm:$0xff]
        %v733 = vld [vmem:[#allocation5 + $0x938] sm:$0xff]
        %v734 = vld [vmem:[#allocation5 + $0x940] sm:$0xff]
        %v735 = vld [vmem:[#allocation5 + $0x948] sm:$0xff]
        %v736 = vld [vmem:[#allocation5 + $0x950] sm:$0xff]
        %v737 = vld [vmem:[#allocation5 + $0x958] sm:$0xff]
        %v738 = vld [vmem:[#allocation5 + $0x960] sm:$0xff]
        %v739 = vld [vmem:[#allocation5 + $0x968] sm:$0xff]
        %v740 = vld [vmem:[#allocation5 + $0x970] sm:$0xff]
        %v741 = vld [vmem:[#allocation5 + $0x978] sm:$0xff]
        %v742 = vld [vmem:[#allocation5 + $0x980] sm:$0xff]
        %v743 = vld [vmem:[#allocation5 + $0x988] sm:$0xff]
        %v744 = vld [vmem:[#allocation5 + $0x990] sm:$0xff]
        %v745 = vld [vmem:[#allocation5 + $0x998] sm:$0xff]
        %v746 = vld [vmem:[#allocation5 + $0x9a0] sm:$0xff]
        %v747 = vld [vmem:[#allocation5 + $0x9a8] sm:$0xff]
        %v748 = vld [vmem:[#allocation5 + $0x9b0] sm:$0xff]
        %v749 = vld [vmem:[#allocation5 + $0x9b8] sm:$0xff]
        %v750 = vld [vmem:[#allocation5 + $0x9c0] sm:$0xff]
        %v751 = vld [vmem:[#allocation5 + $0x9c8] sm:$0xff]
        %v752 = vld [vmem:[#allocation5 + $0x9d0] sm:$0xff]
        %v753 = vld [vmem:[#allocation5 + $0x9d8] sm:$0xff]
        %v754 = vld [vmem:[#allocation5 + $0x9e0] sm:$0xff]
        %v755 = vld [vmem:[#allocation5 + $0x9e8] sm:$0xff]
        %v756 = vld [vmem:[#allocation5 + $0x9f0] sm:$0xff]
        %v757 = vld [vmem:[#allocation5 + $0x9f8] sm:$0xff]
        %v758 = vld [vmem:[#allocation5 + $0xa00] sm:$0xff]
        %v759 = vld [vmem:[#allocation5 + $0xa08] sm:$0xff]
        %v760 = vld [vmem:[#allocation5 + $0xa10] sm:$0xff]
        %v761 = vld [vmem:[#allocation5 + $0xa18] sm:$0xff]
        %v762 = vld [vmem:[#allocation5 + $0xa20] sm:$0xff]
        %v763 = vld [vmem:[#allocation5 + $0xa28] sm:$0xff]
        %v764 = vld [vmem:[#allocation5 + $0xa30] sm:$0xff]
        %v765 = vld [vmem:[#allocation5 + $0xa38] sm:$0xff]
        %v766 = vld [vmem:[#allocation5 + $0xa40] sm:$0xff]
        %v767 = vld [vmem:[#allocation5 + $0xa48] sm:$0xff]
        %v768 = vld [vmem:[#allocation5 + $0xa50] sm:$0xff]
        %v769 = vld [vmem:[#allocation5 + $0xa58] sm:$0xff]
        %v770 = vld [vmem:[#allocation5 + $0xa60] sm:$0xff]
        %v771 = vld [vmem:[#allocation5 + $0xa68] sm:$0xff]
        %v772 = vld [vmem:[#allocation5 + $0xa70] sm:$0xff]
        %v773 = vld [vmem:[#allocation5 + $0xa78] sm:$0xff]
        %v774 = vld [vmem:[#allocation5 + $0xa80] sm:$0xff]
        %v775 = vld [vmem:[#allocation5 + $0xa88] sm:$0xff]
        %v776 = vld [vmem:[#allocation5 + $0xa90] sm:$0xff]
        %v777 = vld [vmem:[#allocation5 + $0xa98] sm:$0xff]
        %v778 = vld [vmem:[#allocation5 + $0xaa0] sm:$0xff]
        %v779 = vld [vmem:[#allocation5 + $0xaa8] sm:$0xff]
        %v780 = vld [vmem:[#allocation5 + $0xab0] sm:$0xff]
        %v781 = vld [vmem:[#allocation5 + $0xab8] sm:$0xff]
        %v782 = vld [vmem:[#allocation5 + $0xac0] sm:$0xff]
        %v783 = vld [vmem:[#allocation5 + $0xac8] sm:$0xff]
        %v784 = vld [vmem:[#allocation5 + $0xad0] sm:$0xff]
        %v785 = vld [vmem:[#allocation5 + $0xad8] sm:$0xff]
        %v786 = vld [vmem:[#allocation5 + $0xae0] sm:$0xff]
        %v787 = vld [vmem:[#allocation5 + $0xae8] sm:$0xff]
        %v788 = vld [vmem:[#allocation5 + $0xaf0] sm:$0xff]
        %v789 = vld [vmem:[#allocation5 + $0xaf8] sm:$0xff]
        %v790 = vld [vmem:[#allocation5 + $0xb00] sm:$0xff]
        %v791 = vld [vmem:[#allocation5 + $0xb08] sm:$0xff]
        %v792 = vld [vmem:[#allocation5 + $0xb10] sm:$0xff]
        %v793 = vld [vmem:[#allocation5 + $0xb18] sm:$0xff]
        %v794 = vld [vmem:[#allocation5 + $0xb20] sm:$0xff]
        %v795 = vld [vmem:[#allocation5 + $0xb28] sm:$0xff]
        %v796 = vld [vmem:[#allocation5 + $0xb30] sm:$0xff]
        %v797 = vld [vmem:[#allocation5 + $0xb38] sm:$0xff]
        %v798 = vld [vmem:[#allocation5 + $0xb40] sm:$0xff]
        %v799 = vld [vmem:[#allocation5 + $0xb48] sm:$0xff]
        %v800 = vld [vmem:[#allocation5 + $0xb50] sm:$0xff]
        %v801 = vld [vmem:[#allocation5 + $0xb58] sm:$0xff]
        %v802 = vld [vmem:[#allocation5 + $0xb60] sm:$0xff]
        %v803 = vld [vmem:[#allocation5 + $0xb68] sm:$0xff]
        %v804 = vld [vmem:[#allocation5 + $0xb70] sm:$0xff]
        %v805 = vld [vmem:[#allocation5 + $0xb78] sm:$0xff]
        %v806 = vld [vmem:[#allocation5 + $0xb80] sm:$0xff]
        %v807 = vld [vmem:[#allocation5 + $0xb88] sm:$0xff]
        %v808 = vld [vmem:[#allocation5 + $0xb90] sm:$0xff]
        %v809 = vld [vmem:[#allocation5 + $0xb98] sm:$0xff]
        %v810 = vld [vmem:[#allocation5 + $0xba0] sm:$0xff]
        %v811 = vld [vmem:[#allocation5 + $0xba8] sm:$0xff]
        %v812 = vld [vmem:[#allocation5 + $0xbb0] sm:$0xff]
        %v813 = vld [vmem:[#allocation5 + $0xbb8] sm:$0xff]
        %v814 = vld [vmem:[#allocation5 + $0xbc0] sm:$0xff]
        %v815 = vld [vmem:[#allocation5 + $0xbc8] sm:$0xff]
        %v816 = vld [vmem:[#allocation5 + $0xbd0] sm:$0xff]
        %v817 = vld [vmem:[#allocation5 + $0xbd8] sm:$0xff]
        %v818 = vld [vmem:[#allocation5 + $0xbe0] sm:$0xff]
        %v819 = vld [vmem:[#allocation5 + $0xbe8] sm:$0xff]
        %v820 = vld [vmem:[#allocation5 + $0xbf0] sm:$0xff]
        %v821 = vld [vmem:[#allocation5 + $0xbf8] sm:$0xff]
        %v822 = vld [vmem:[#allocation7] sm:$0x3]
        %v824 = vperm.slane %v822, 0
        %v825 = vperm.slane %v822, 1
        %v1212 = vunpack.c.l.b16 %v438
        %v1213 = vunpack.c.h.b16 %v438
        %v1214 = vunpack.c.l.b16 %v439
        %v1215 = vunpack.c.h.b16 %v439
        %v1216 = vunpack.c.l.b16 %v440
        %v1217 = vunpack.c.h.b16 %v440
        %v1218 = vunpack.c.l.b16 %v441
        %v1219 = vunpack.c.h.b16 %v441
        %v1220 = vunpack.c.l.b16 %v442
        %v1221 = vunpack.c.h.b16 %v442
        %v1222 = vunpack.c.l.b16 %v443
        %v1223 = vunpack.c.h.b16 %v443
        %v1224 = vunpack.c.l.b16 %v444
        %v1225 = vunpack.c.h.b16 %v444
        %v1226 = vunpack.c.l.b16 %v445
        %v1227 = vunpack.c.h.b16 %v445
        %v1228 = vunpack.c.l.b16 %v446
        %v1229 = vunpack.c.h.b16 %v446
        %v1230 = vunpack.c.l.b16 %v447
        %v1231 = vunpack.c.h.b16 %v447
        %v1232 = vunpack.c.l.b16 %v448
        %v1233 = vunpack.c.h.b16 %v448
        %v1234 = vunpack.c.l.b16 %v449
        %v1235 = vunpack.c.h.b16 %v449
        %v1236 = vunpack.c.l.b16 %v450
        %v1237 = vunpack.c.h.b16 %v450
        %v1238 = vunpack.c.l.b16 %v451
        %v1239 = vunpack.c.h.b16 %v451
        %v1240 = vunpack.c.l.b16 %v452
        %v1241 = vunpack.c.h.b16 %v452
        %v1242 = vunpack.c.l.b16 %v453
        %v1243 = vunpack.c.h.b16 %v453
        %v1244 = vunpack.c.l.b16 %v454
        %v1245 = vunpack.c.h.b16 %v454
        %v1246 = vunpack.c.l.b16 %v455
        %v1247 = vunpack.c.h.b16 %v455
        %v1248 = vunpack.c.l.b16 %v456
        %v1249 = vunpack.c.h.b16 %v456
        %v1250 = vunpack.c.l.b16 %v457
        %v1251 = vunpack.c.h.b16 %v457
        %v1252 = vunpack.c.l.b16 %v458
        %v1253 = vunpack.c.h.b16 %v458
        %v1254 = vunpack.c.l.b16 %v459
        %v1255 = vunpack.c.h.b16 %v459
        %v1256 = vunpack.c.l.b16 %v460
        %v1257 = vunpack.c.h.b16 %v460
        %v1258 = vunpack.c.l.b16 %v461
        %v1259 = vunpack.c.h.b16 %v461
        %v1260 = vunpack.c.l.b16 %v462
        %v1261 = vunpack.c.h.b16 %v462
        %v1262 = vunpack.c.l.b16 %v463
        %v1263 = vunpack.c.h.b16 %v463
        %v1264 = vunpack.c.l.b16 %v464
        %v1265 = vunpack.c.h.b16 %v464
        %v1266 = vunpack.c.l.b16 %v465
        %v1267 = vunpack.c.h.b16 %v465
        %v1268 = vunpack.c.l.b16 %v466
        %v1269 = vunpack.c.h.b16 %v466
        %v1270 = vunpack.c.l.b16 %v467
        %v1271 = vunpack.c.h.b16 %v467
        %v1272 = vunpack.c.l.b16 %v468
        %v1273 = vunpack.c.h.b16 %v468
        %v1274 = vunpack.c.l.b16 %v469
        %v1275 = vunpack.c.h.b16 %v469
        %v1276 = vunpack.c.l.b16 %v470
        %v1277 = vunpack.c.h.b16 %v470
        %v1278 = vunpack.c.l.b16 %v471
        %v1279 = vunpack.c.h.b16 %v471
        %v1280 = vunpack.c.l.b16 %v472
        %v1281 = vunpack.c.h.b16 %v472
        %v1282 = vunpack.c.l.b16 %v473
        %v1283 = vunpack.c.h.b16 %v473
        %v1284 = vunpack.c.l.b16 %v474
        %v1285 = vunpack.c.h.b16 %v474
        %v1286 = vunpack.c.l.b16 %v475
        %v1287 = vunpack.c.h.b16 %v475
        %v1288 = vunpack.c.l.b16 %v476
        %v1289 = vunpack.c.h.b16 %v476
        %v1290 = vunpack.c.l.b16 %v477
        %v1291 = vunpack.c.h.b16 %v477
        %v1292 = vunpack.c.l.b16 %v478
        %v1293 = vunpack.c.h.b16 %v478
        %v1294 = vunpack.c.l.b16 %v479
        %v1295 = vunpack.c.h.b16 %v479
        %v1296 = vunpack.c.l.b16 %v480
        %v1297 = vunpack.c.h.b16 %v480
        %v1298 = vunpack.c.l.b16 %v481
        %v1299 = vunpack.c.h.b16 %v481
        %v1300 = vunpack.c.l.b16 %v482
        %v1301 = vunpack.c.h.b16 %v482
        %v1302 = vunpack.c.l.b16 %v483
        %v1303 = vunpack.c.h.b16 %v483
        %v1304 = vunpack.c.l.b16 %v484
        %v1305 = vunpack.c.h.b16 %v484
        %v1306 = vunpack.c.l.b16 %v485
        %v1307 = vunpack.c.h.b16 %v485
        %v1308 = vunpack.c.l.b16 %v486
        %v1309 = vunpack.c.h.b16 %v486
        %v1310 = vunpack.c.l.b16 %v487
        %v1311 = vunpack.c.h.b16 %v487
        %v1312 = vunpack.c.l.b16 %v488
        %v1313 = vunpack.c.h.b16 %v488
        %v1314 = vunpack.c.l.b16 %v489
        %v1315 = vunpack.c.h.b16 %v489
        %v1316 = vunpack.c.l.b16 %v490
        %v1317 = vunpack.c.h.b16 %v490
        %v1318 = vunpack.c.l.b16 %v491
        %v1319 = vunpack.c.h.b16 %v491
        %v1320 = vunpack.c.l.b16 %v492
        %v1321 = vunpack.c.h.b16 %v492
        %v1322 = vunpack.c.l.b16 %v493
        %v1323 = vunpack.c.h.b16 %v493
        %v1324 = vunpack.c.l.b16 %v494
        %v1325 = vunpack.c.h.b16 %v494
        %v1326 = vunpack.c.l.b16 %v495
        %v1327 = vunpack.c.h.b16 %v495
        %v1328 = vunpack.c.l.b16 %v496
        %v1329 = vunpack.c.h.b16 %v496
        %v1330 = vunpack.c.l.b16 %v497
        %v1331 = vunpack.c.h.b16 %v497
        %v1332 = vunpack.c.l.b16 %v498
        %v1333 = vunpack.c.h.b16 %v498
        %v1334 = vunpack.c.l.b16 %v499
        %v1335 = vunpack.c.h.b16 %v499
        %v1336 = vunpack.c.l.b16 %v500
        %v1337 = vunpack.c.h.b16 %v500
        %v1338 = vunpack.c.l.b16 %v501
        %v1339 = vunpack.c.h.b16 %v501
        %v1340 = vunpack.c.l.b16 %v502
        %v1341 = vunpack.c.h.b16 %v502
        %v1342 = vunpack.c.l.b16 %v503
        %v1343 = vunpack.c.h.b16 %v503
        %v1344 = vunpack.c.l.b16 %v504
        %v1345 = vunpack.c.h.b16 %v504
        %v1346 = vunpack.c.l.b16 %v505
        %v1347 = vunpack.c.h.b16 %v505
        %v1348 = vunpack.c.l.b16 %v506
        %v1349 = vunpack.c.h.b16 %v506
        %v1350 = vunpack.c.l.b16 %v507
        %v1351 = vunpack.c.h.b16 %v507
        %v1352 = vunpack.c.l.b16 %v508
        %v1353 = vunpack.c.h.b16 %v508
        %v1354 = vunpack.c.l.b16 %v509
        %v1355 = vunpack.c.h.b16 %v509
        %v1356 = vunpack.c.l.b16 %v510
        %v1357 = vunpack.c.h.b16 %v510
        %v1358 = vunpack.c.l.b16 %v511
        %v1359 = vunpack.c.h.b16 %v511
        %v1360 = vunpack.c.l.b16 %v512
        %v1361 = vunpack.c.h.b16 %v512
        %v1362 = vunpack.c.l.b16 %v513
        %v1363 = vunpack.c.h.b16 %v513
        %v1364 = vunpack.c.l.b16 %v514
        %v1365 = vunpack.c.h.b16 %v514
        %v1366 = vunpack.c.l.b16 %v515
        %v1367 = vunpack.c.h.b16 %v515
        %v1368 = vunpack.c.l.b16 %v516
        %v1369 = vunpack.c.h.b16 %v516
        %v1370 = vunpack.c.l.b16 %v517
        %v1371 = vunpack.c.h.b16 %v517
        %v1372 = vunpack.c.l.b16 %v518
        %v1373 = vunpack.c.h.b16 %v518
        %v1374 = vunpack.c.l.b16 %v519
        %v1375 = vunpack.c.h.b16 %v519
        %v1376 = vunpack.c.l.b16 %v520
        %v1377 = vunpack.c.h.b16 %v520
        %v1378 = vunpack.c.l.b16 %v521
        %v1379 = vunpack.c.h.b16 %v521
        %v1380 = vunpack.c.l.b16 %v522
        %v1381 = vunpack.c.h.b16 %v522
        %v1382 = vunpack.c.l.b16 %v523
        %v1383 = vunpack.c.h.b16 %v523
        %v1384 = vunpack.c.l.b16 %v524
        %v1385 = vunpack.c.h.b16 %v524
        %v1386 = vunpack.c.l.b16 %v525
        %v1387 = vunpack.c.h.b16 %v525
        %v1388 = vunpack.c.l.b16 %v526
        %v1389 = vunpack.c.h.b16 %v526
        %v1390 = vunpack.c.l.b16 %v527
        %v1391 = vunpack.c.h.b16 %v527
        %v1392 = vunpack.c.l.b16 %v528
        %v1393 = vunpack.c.h.b16 %v528
        %v1394 = vunpack.c.l.b16 %v529
        %v1395 = vunpack.c.h.b16 %v529
        %v1396 = vunpack.c.l.b16 %v530
        %v1397 = vunpack.c.h.b16 %v530
        %v1398 = vunpack.c.l.b16 %v531
        %v1399 = vunpack.c.h.b16 %v531
        %v1400 = vunpack.c.l.b16 %v532
        %v1401 = vunpack.c.h.b16 %v532
        %v1402 = vunpack.c.l.b16 %v533
        %v1403 = vunpack.c.h.b16 %v533
        %v1404 = vunpack.c.l.b16 %v534
        %v1405 = vunpack.c.h.b16 %v534
        %v1406 = vunpack.c.l.b16 %v535
        %v1407 = vunpack.c.h.b16 %v535
        %v1408 = vunpack.c.l.b16 %v536
        %v1409 = vunpack.c.h.b16 %v536
        %v1410 = vunpack.c.l.b16 %v537
        %v1411 = vunpack.c.h.b16 %v537
        %v1412 = vunpack.c.l.b16 %v538
        %v1413 = vunpack.c.h.b16 %v538
        %v1414 = vunpack.c.l.b16 %v539
        %v1415 = vunpack.c.h.b16 %v539
        %v1416 = vunpack.c.l.b16 %v540
        %v1417 = vunpack.c.h.b16 %v540
        %v1418 = vunpack.c.l.b16 %v541
        %v1419 = vunpack.c.h.b16 %v541
        %v1420 = vunpack.c.l.b16 %v542
        %v1421 = vunpack.c.h.b16 %v542
        %v1422 = vunpack.c.l.b16 %v543
        %v1423 = vunpack.c.h.b16 %v543
        %v1424 = vunpack.c.l.b16 %v544
        %v1425 = vunpack.c.h.b16 %v544
        %v1426 = vunpack.c.l.b16 %v545
        %v1427 = vunpack.c.h.b16 %v545
        %v1428 = vunpack.c.l.b16 %v546
        %v1429 = vunpack.c.h.b16 %v546
        %v1430 = vunpack.c.l.b16 %v547
        %v1431 = vunpack.c.h.b16 %v547
        %v1432 = vunpack.c.l.b16 %v548
        %v1433 = vunpack.c.h.b16 %v548
        %v1434 = vunpack.c.l.b16 %v549
        %v1435 = vunpack.c.h.b16 %v549
        %v1436 = vunpack.c.l.b16 %v550
        %v1437 = vunpack.c.h.b16 %v550
        %v1438 = vunpack.c.l.b16 %v551
        %v1439 = vunpack.c.h.b16 %v551
        %v1440 = vunpack.c.l.b16 %v552
        %v1441 = vunpack.c.h.b16 %v552
        %v1442 = vunpack.c.l.b16 %v553
        %v1443 = vunpack.c.h.b16 %v553
        %v1444 = vunpack.c.l.b16 %v554
        %v1445 = vunpack.c.h.b16 %v554
        %v1446 = vunpack.c.l.b16 %v555
        %v1447 = vunpack.c.h.b16 %v555
        %v1448 = vunpack.c.l.b16 %v556
        %v1449 = vunpack.c.h.b16 %v556
        %v1450 = vunpack.c.l.b16 %v557
        %v1451 = vunpack.c.h.b16 %v557
        %v1452 = vunpack.c.l.b16 %v558
        %v1453 = vunpack.c.h.b16 %v558
        %v1454 = vunpack.c.l.b16 %v559
        %v1455 = vunpack.c.h.b16 %v559
        %v1456 = vunpack.c.l.b16 %v560
        %v1457 = vunpack.c.h.b16 %v560
        %v1458 = vunpack.c.l.b16 %v561
        %v1459 = vunpack.c.h.b16 %v561
        %v1460 = vunpack.c.l.b16 %v562
        %v1461 = vunpack.c.h.b16 %v562
        %v1462 = vunpack.c.l.b16 %v563
        %v1463 = vunpack.c.h.b16 %v563
        %v1464 = vunpack.c.l.b16 %v564
        %v1465 = vunpack.c.h.b16 %v564
        %v1466 = vunpack.c.l.b16 %v565
        %v1467 = vunpack.c.h.b16 %v565
        %v1468 = vunpack.c.l.b16 %v566
        %v1469 = vunpack.c.h.b16 %v566
        %v1470 = vunpack.c.l.b16 %v567
        %v1471 = vunpack.c.h.b16 %v567
        %v1472 = vunpack.c.l.b16 %v568
        %v1473 = vunpack.c.h.b16 %v568
        %v1474 = vunpack.c.l.b16 %v569
        %v1475 = vunpack.c.h.b16 %v569
        %v1476 = vunpack.c.l.b16 %v570
        %v1477 = vunpack.c.h.b16 %v570
        %v1478 = vunpack.c.l.b16 %v571
        %v1479 = vunpack.c.h.b16 %v571
        %v1480 = vunpack.c.l.b16 %v572
        %v1481 = vunpack.c.h.b16 %v572
        %v1482 = vunpack.c.l.b16 %v573
        %v1483 = vunpack.c.h.b16 %v573
        %v1484 = vunpack.c.l.b16 %v574
        %v1485 = vunpack.c.h.b16 %v574
        %v1486 = vunpack.c.l.b16 %v575
        %v1487 = vunpack.c.h.b16 %v575
        %v1488 = vunpack.c.l.b16 %v576
        %v1489 = vunpack.c.h.b16 %v576
        %v1490 = vunpack.c.l.b16 %v577
        %v1491 = vunpack.c.h.b16 %v577
        %v1492 = vunpack.c.l.b16 %v578
        %v1493 = vunpack.c.h.b16 %v578
        %v1494 = vunpack.c.l.b16 %v579
        %v1495 = vunpack.c.h.b16 %v579
        %v1496 = vunpack.c.l.b16 %v580
        %v1497 = vunpack.c.h.b16 %v580
        %v1498 = vunpack.c.l.b16 %v581
        %v1499 = vunpack.c.h.b16 %v581
        %v1500 = vunpack.c.l.b16 %v582
        %v1501 = vunpack.c.h.b16 %v582
        %v1502 = vunpack.c.l.b16 %v583
        %v1503 = vunpack.c.h.b16 %v583
        %v1504 = vunpack.c.l.b16 %v584
        %v1505 = vunpack.c.h.b16 %v584
        %v1506 = vunpack.c.l.b16 %v585
        %v1507 = vunpack.c.h.b16 %v585
        %v1508 = vunpack.c.l.b16 %v586
        %v1509 = vunpack.c.h.b16 %v586
        %v1510 = vunpack.c.l.b16 %v587
        %v1511 = vunpack.c.h.b16 %v587
        %v1512 = vunpack.c.l.b16 %v588
        %v1513 = vunpack.c.h.b16 %v588
        %v1514 = vunpack.c.l.b16 %v589
        %v1515 = vunpack.c.h.b16 %v589
        %v1516 = vunpack.c.l.b16 %v590
        %v1517 = vunpack.c.h.b16 %v590
        %v1518 = vunpack.c.l.b16 %v591
        %v1519 = vunpack.c.h.b16 %v591
        %v1520 = vunpack.c.l.b16 %v592
        %v1521 = vunpack.c.h.b16 %v592
        %v1522 = vunpack.c.l.b16 %v593
        %v1523 = vunpack.c.h.b16 %v593
        %v1524 = vunpack.c.l.b16 %v594
        %v1525 = vunpack.c.h.b16 %v594
        %v1526 = vunpack.c.l.b16 %v595
        %v1527 = vunpack.c.h.b16 %v595
        %v1528 = vunpack.c.l.b16 %v596
        %v1529 = vunpack.c.h.b16 %v596
        %v1530 = vunpack.c.l.b16 %v597
        %v1531 = vunpack.c.h.b16 %v597
        %v1532 = vunpack.c.l.b16 %v598
        %v1533 = vunpack.c.h.b16 %v598
        %v1534 = vunpack.c.l.b16 %v599
        %v1535 = vunpack.c.h.b16 %v599
        %v1536 = vunpack.c.l.b16 %v600
        %v1537 = vunpack.c.h.b16 %v600
        %v1538 = vunpack.c.l.b16 %v601
        %v1539 = vunpack.c.h.b16 %v601
        %v1540 = vunpack.c.l.b16 %v602
        %v1541 = vunpack.c.h.b16 %v602
        %v1542 = vunpack.c.l.b16 %v603
        %v1543 = vunpack.c.h.b16 %v603
        %v1544 = vunpack.c.l.b16 %v604
        %v1545 = vunpack.c.h.b16 %v604
        %v1546 = vunpack.c.l.b16 %v605
        %v1547 = vunpack.c.h.b16 %v605
        %v1548 = vunpack.c.l.b16 %v606
        %v1549 = vunpack.c.h.b16 %v606
        %v1550 = vunpack.c.l.b16 %v607
        %v1551 = vunpack.c.h.b16 %v607
        %v1552 = vunpack.c.l.b16 %v608
        %v1553 = vunpack.c.h.b16 %v608
        %v1554 = vunpack.c.l.b16 %v609
        %v1555 = vunpack.c.h.b16 %v609
        %v1556 = vunpack.c.l.b16 %v610
        %v1557 = vunpack.c.h.b16 %v610
        %v1558 = vunpack.c.l.b16 %v611
        %v1559 = vunpack.c.h.b16 %v611
        %v1560 = vunpack.c.l.b16 %v612
        %v1561 = vunpack.c.h.b16 %v612
        %v1562 = vunpack.c.l.b16 %v613
        %v1563 = vunpack.c.h.b16 %v613
        %v1564 = vunpack.c.l.b16 %v614
        %v1565 = vunpack.c.h.b16 %v614
        %v1566 = vunpack.c.l.b16 %v615
        %v1567 = vunpack.c.h.b16 %v615
        %v1568 = vunpack.c.l.b16 %v616
        %v1569 = vunpack.c.h.b16 %v616
        %v1570 = vunpack.c.l.b16 %v617
        %v1571 = vunpack.c.h.b16 %v617
        %v1572 = vunpack.c.l.b16 %v618
        %v1573 = vunpack.c.h.b16 %v618
        %v1574 = vunpack.c.l.b16 %v619
        %v1575 = vunpack.c.h.b16 %v619
        %v1576 = vunpack.c.l.b16 %v620
        %v1577 = vunpack.c.h.b16 %v620
        %v1578 = vunpack.c.l.b16 %v621
        %v1579 = vunpack.c.h.b16 %v621
        %v1580 = vunpack.c.l.b16 %v622
        %v1581 = vunpack.c.h.b16 %v622
        %v1582 = vunpack.c.l.b16 %v623
        %v1583 = vunpack.c.h.b16 %v623
        %v1584 = vunpack.c.l.b16 %v624
        %v1585 = vunpack.c.h.b16 %v624
        %v1586 = vunpack.c.l.b16 %v625
        %v1587 = vunpack.c.h.b16 %v625
        %v1588 = vunpack.c.l.b16 %v626
        %v1589 = vunpack.c.h.b16 %v626
        %v1590 = vunpack.c.l.b16 %v627
        %v1591 = vunpack.c.h.b16 %v627
        %v1592 = vunpack.c.l.b16 %v628
        %v1593 = vunpack.c.h.b16 %v628
        %v1594 = vunpack.c.l.b16 %v629
        %v1595 = vunpack.c.h.b16 %v629
        %v1596 = vunpack.c.l.b16 %v630
        %v1597 = vunpack.c.h.b16 %v630
        %v1598 = vunpack.c.l.b16 %v631
        %v1599 = vunpack.c.h.b16 %v631
        %v1600 = vunpack.c.l.b16 %v632
        %v1601 = vunpack.c.h.b16 %v632
        %v1602 = vunpack.c.l.b16 %v633
        %v1603 = vunpack.c.h.b16 %v633
        %v1604 = vunpack.c.l.b16 %v634
        %v1605 = vunpack.c.h.b16 %v634
        %v1606 = vunpack.c.l.b16 %v635
        %v1607 = vunpack.c.h.b16 %v635
        %v1608 = vunpack.c.l.b16 %v636
        %v1609 = vunpack.c.h.b16 %v636
        %v1610 = vunpack.c.l.b16 %v637
        %v1611 = vunpack.c.h.b16 %v637
        %v1612 = vunpack.c.l.b16 %v638
        %v1613 = vunpack.c.h.b16 %v638
        %v1614 = vunpack.c.l.b16 %v639
        %v1615 = vunpack.c.h.b16 %v639
        %v1616 = vunpack.c.l.b16 %v640
        %v1617 = vunpack.c.h.b16 %v640
        %v1618 = vunpack.c.l.b16 %v641
        %v1619 = vunpack.c.h.b16 %v641
        %v1620 = vunpack.c.l.b16 %v642
        %v1621 = vunpack.c.h.b16 %v642
        %v1622 = vunpack.c.l.b16 %v643
        %v1623 = vunpack.c.h.b16 %v643
        %v1624 = vunpack.c.l.b16 %v644
        %v1625 = vunpack.c.h.b16 %v644
        %v1626 = vunpack.c.l.b16 %v645
        %v1627 = vunpack.c.h.b16 %v645
        %v1628 = vunpack.c.l.b16 %v646
        %v1629 = vunpack.c.h.b16 %v646
        %v1630 = vunpack.c.l.b16 %v647
        %v1631 = vunpack.c.h.b16 %v647
        %v1632 = vunpack.c.l.b16 %v648
        %v1633 = vunpack.c.h.b16 %v648
        %v1634 = vunpack.c.l.b16 %v649
        %v1635 = vunpack.c.h.b16 %v649
        %v1636 = vunpack.c.l.b16 %v650
        %v1637 = vunpack.c.h.b16 %v650
        %v1638 = vunpack.c.l.b16 %v651
        %v1639 = vunpack.c.h.b16 %v651
        %v1640 = vunpack.c.l.b16 %v652
        %v1641 = vunpack.c.h.b16 %v652
        %v1642 = vunpack.c.l.b16 %v653
        %v1643 = vunpack.c.h.b16 %v653
        %v1644 = vunpack.c.l.b16 %v654
        %v1645 = vunpack.c.h.b16 %v654
        %v1646 = vunpack.c.l.b16 %v655
        %v1647 = vunpack.c.h.b16 %v655
        %v1648 = vunpack.c.l.b16 %v656
        %v1649 = vunpack.c.h.b16 %v656
        %v1650 = vunpack.c.l.b16 %v657
        %v1651 = vunpack.c.h.b16 %v657
        %v1652 = vunpack.c.l.b16 %v658
        %v1653 = vunpack.c.h.b16 %v658
        %v1654 = vunpack.c.l.b16 %v659
        %v1655 = vunpack.c.h.b16 %v659
        %v1656 = vunpack.c.l.b16 %v660
        %v1657 = vunpack.c.h.b16 %v660
        %v1658 = vunpack.c.l.b16 %v661
        %v1659 = vunpack.c.h.b16 %v661
        %v1660 = vunpack.c.l.b16 %v662
        %v1661 = vunpack.c.h.b16 %v662
        %v1662 = vunpack.c.l.b16 %v663
        %v1663 = vunpack.c.h.b16 %v663
        %v1664 = vunpack.c.l.b16 %v664
        %v1665 = vunpack.c.h.b16 %v664
        %v1666 = vunpack.c.l.b16 %v665
        %v1667 = vunpack.c.h.b16 %v665
        %v1668 = vunpack.c.l.b16 %v666
        %v1669 = vunpack.c.h.b16 %v666
        %v1670 = vunpack.c.l.b16 %v667
        %v1671 = vunpack.c.h.b16 %v667
        %v1672 = vunpack.c.l.b16 %v668
        %v1673 = vunpack.c.h.b16 %v668
        %v1674 = vunpack.c.l.b16 %v669
        %v1675 = vunpack.c.h.b16 %v669
        %v1676 = vunpack.c.l.b16 %v670
        %v1677 = vunpack.c.h.b16 %v670
        %v1678 = vunpack.c.l.b16 %v671
        %v1679 = vunpack.c.h.b16 %v671
        %v1680 = vunpack.c.l.b16 %v672
        %v1681 = vunpack.c.h.b16 %v672
        %v1682 = vunpack.c.l.b16 %v673
        %v1683 = vunpack.c.h.b16 %v673
        %v1684 = vunpack.c.l.b16 %v674
        %v1685 = vunpack.c.h.b16 %v674
        %v1686 = vunpack.c.l.b16 %v675
        %v1687 = vunpack.c.h.b16 %v675
        %v1688 = vunpack.c.l.b16 %v676
        %v1689 = vunpack.c.h.b16 %v676
        %v1690 = vunpack.c.l.b16 %v677
        %v1691 = vunpack.c.h.b16 %v677
        %v1692 = vunpack.c.l.b16 %v678
        %v1693 = vunpack.c.h.b16 %v678
        %v1694 = vunpack.c.l.b16 %v679
        %v1695 = vunpack.c.h.b16 %v679
        %v1696 = vunpack.c.l.b16 %v680
        %v1697 = vunpack.c.h.b16 %v680
        %v1698 = vunpack.c.l.b16 %v681
        %v1699 = vunpack.c.h.b16 %v681
        %v1700 = vunpack.c.l.b16 %v682
        %v1701 = vunpack.c.h.b16 %v682
        %v1702 = vunpack.c.l.b16 %v683
        %v1703 = vunpack.c.h.b16 %v683
        %v1704 = vunpack.c.l.b16 %v684
        %v1705 = vunpack.c.h.b16 %v684
        %v1706 = vunpack.c.l.b16 %v685
        %v1707 = vunpack.c.h.b16 %v685
        %v1708 = vunpack.c.l.b16 %v686
        %v1709 = vunpack.c.h.b16 %v686
        %v1710 = vunpack.c.l.b16 %v687
        %v1711 = vunpack.c.h.b16 %v687
        %v1712 = vunpack.c.l.b16 %v688
        %v1713 = vunpack.c.h.b16 %v688
        %v1714 = vunpack.c.l.b16 %v689
        %v1715 = vunpack.c.h.b16 %v689
        %v1716 = vunpack.c.l.b16 %v690
        %v1717 = vunpack.c.h.b16 %v690
        %v1718 = vunpack.c.l.b16 %v691
        %v1719 = vunpack.c.h.b16 %v691
        %v1720 = vunpack.c.l.b16 %v692
        %v1721 = vunpack.c.h.b16 %v692
        %v1722 = vunpack.c.l.b16 %v693
        %v1723 = vunpack.c.h.b16 %v693
        %v1724 = vunpack.c.l.b16 %v694
        %v1725 = vunpack.c.h.b16 %v694
        %v1726 = vunpack.c.l.b16 %v695
        %v1727 = vunpack.c.h.b16 %v695
        %v1728 = vunpack.c.l.b16 %v696
        %v1729 = vunpack.c.h.b16 %v696
        %v1730 = vunpack.c.l.b16 %v697
        %v1731 = vunpack.c.h.b16 %v697
        %v1732 = vunpack.c.l.b16 %v698
        %v1733 = vunpack.c.h.b16 %v698
        %v1734 = vunpack.c.l.b16 %v699
        %v1735 = vunpack.c.h.b16 %v699
        %v1736 = vunpack.c.l.b16 %v700
        %v1737 = vunpack.c.h.b16 %v700
        %v1738 = vunpack.c.l.b16 %v701
        %v1739 = vunpack.c.h.b16 %v701
        %v1740 = vunpack.c.l.b16 %v702
        %v1741 = vunpack.c.h.b16 %v702
        %v1742 = vunpack.c.l.b16 %v703
        %v1743 = vunpack.c.h.b16 %v703
        %v1744 = vunpack.c.l.b16 %v704
        %v1745 = vunpack.c.h.b16 %v704
        %v1746 = vunpack.c.l.b16 %v705
        %v1747 = vunpack.c.h.b16 %v705
        %v1748 = vunpack.c.l.b16 %v706
        %v1749 = vunpack.c.h.b16 %v706
        %v1750 = vunpack.c.l.b16 %v707
        %v1751 = vunpack.c.h.b16 %v707
        %v1752 = vunpack.c.l.b16 %v708
        %v1753 = vunpack.c.h.b16 %v708
        %v1754 = vunpack.c.l.b16 %v709
        %v1755 = vunpack.c.h.b16 %v709
        %v1756 = vunpack.c.l.b16 %v710
        %v1757 = vunpack.c.h.b16 %v710
        %v1758 = vunpack.c.l.b16 %v711
        %v1759 = vunpack.c.h.b16 %v711
        %v1760 = vunpack.c.l.b16 %v712
        %v1761 = vunpack.c.h.b16 %v712
        %v1762 = vunpack.c.l.b16 %v713
        %v1763 = vunpack.c.h.b16 %v713
        %v1764 = vunpack.c.l.b16 %v714
        %v1765 = vunpack.c.h.b16 %v714
        %v1766 = vunpack.c.l.b16 %v715
        %v1767 = vunpack.c.h.b16 %v715
        %v1768 = vunpack.c.l.b16 %v716
        %v1769 = vunpack.c.h.b16 %v716
        %v1770 = vunpack.c.l.b16 %v717
        %v1771 = vunpack.c.h.b16 %v717
        %v1772 = vunpack.c.l.b16 %v718
        %v1773 = vunpack.c.h.b16 %v718
        %v1774 = vunpack.c.l.b16 %v719
        %v1775 = vunpack.c.h.b16 %v719
        %v1776 = vunpack.c.l.b16 %v720
        %v1777 = vunpack.c.h.b16 %v720
        %v1778 = vunpack.c.l.b16 %v721
        %v1779 = vunpack.c.h.b16 %v721
        %v1780 = vunpack.c.l.b16 %v722
        %v1781 = vunpack.c.h.b16 %v722
        %v1782 = vunpack.c.l.b16 %v723
        %v1783 = vunpack.c.h.b16 %v723
        %v1784 = vunpack.c.l.b16 %v724
        %v1785 = vunpack.c.h.b16 %v724
        %v1786 = vunpack.c.l.b16 %v725
        %v1787 = vunpack.c.h.b16 %v725
        %v1788 = vunpack.c.l.b16 %v726
        %v1789 = vunpack.c.h.b16 %v726
        %v1790 = vunpack.c.l.b16 %v727
        %v1791 = vunpack.c.h.b16 %v727
        %v1792 = vunpack.c.l.b16 %v728
        %v1793 = vunpack.c.h.b16 %v728
        %v1794 = vunpack.c.l.b16 %v729
        %v1795 = vunpack.c.h.b16 %v729
        %v1796 = vunpack.c.l.b16 %v730
        %v1797 = vunpack.c.h.b16 %v730
        %v1798 = vunpack.c.l.b16 %v731
        %v1799 = vunpack.c.h.b16 %v731
        %v1800 = vunpack.c.l.b16 %v732
        %v1801 = vunpack.c.h.b16 %v732
        %v1802 = vunpack.c.l.b16 %v733
        %v1803 = vunpack.c.h.b16 %v733
        %v1804 = vunpack.c.l.b16 %v734
        %v1805 = vunpack.c.h.b16 %v734
        %v1806 = vunpack.c.l.b16 %v735
        %v1807 = vunpack.c.h.b16 %v735
        %v1808 = vunpack.c.l.b16 %v736
        %v1809 = vunpack.c.h.b16 %v736
        %v1810 = vunpack.c.l.b16 %v737
        %v1811 = vunpack.c.h.b16 %v737
        %v1812 = vunpack.c.l.b16 %v738
        %v1813 = vunpack.c.h.b16 %v738
        %v1814 = vunpack.c.l.b16 %v739
        %v1815 = vunpack.c.h.b16 %v739
        %v1816 = vunpack.c.l.b16 %v740
        %v1817 = vunpack.c.h.b16 %v740
        %v1818 = vunpack.c.l.b16 %v741
        %v1819 = vunpack.c.h.b16 %v741
        %v1820 = vunpack.c.l.b16 %v742
        %v1821 = vunpack.c.h.b16 %v742
        %v1822 = vunpack.c.l.b16 %v743
        %v1823 = vunpack.c.h.b16 %v743
        %v1824 = vunpack.c.l.b16 %v744
        %v1825 = vunpack.c.h.b16 %v744
        %v1826 = vunpack.c.l.b16 %v745
        %v1827 = vunpack.c.h.b16 %v745
        %v1828 = vunpack.c.l.b16 %v746
        %v1829 = vunpack.c.h.b16 %v746
        %v1830 = vunpack.c.l.b16 %v747
        %v1831 = vunpack.c.h.b16 %v747
        %v1832 = vunpack.c.l.b16 %v748
        %v1833 = vunpack.c.h.b16 %v748
        %v1834 = vunpack.c.l.b16 %v749
        %v1835 = vunpack.c.h.b16 %v749
        %v1836 = vunpack.c.l.b16 %v750
        %v1837 = vunpack.c.h.b16 %v750
        %v1838 = vunpack.c.l.b16 %v751
        %v1839 = vunpack.c.h.b16 %v751
        %v1840 = vunpack.c.l.b16 %v752
        %v1841 = vunpack.c.h.b16 %v752
        %v1842 = vunpack.c.l.b16 %v753
        %v1843 = vunpack.c.h.b16 %v753
        %v1844 = vunpack.c.l.b16 %v754
        %v1845 = vunpack.c.h.b16 %v754
        %v1846 = vunpack.c.l.b16 %v755
        %v1847 = vunpack.c.h.b16 %v755
        %v1848 = vunpack.c.l.b16 %v756
        %v1849 = vunpack.c.h.b16 %v756
        %v1850 = vunpack.c.l.b16 %v757
        %v1851 = vunpack.c.h.b16 %v757
        %v1852 = vunpack.c.l.b16 %v758
        %v1853 = vunpack.c.h.b16 %v758
        %v1854 = vunpack.c.l.b16 %v759
        %v1855 = vunpack.c.h.b16 %v759
        %v1856 = vunpack.c.l.b16 %v760
        %v1857 = vunpack.c.h.b16 %v760
        %v1858 = vunpack.c.l.b16 %v761
        %v1859 = vunpack.c.h.b16 %v761
        %v1860 = vunpack.c.l.b16 %v762
        %v1861 = vunpack.c.h.b16 %v762
        %v1862 = vunpack.c.l.b16 %v763
        %v1863 = vunpack.c.h.b16 %v763
        %v1864 = vunpack.c.l.b16 %v764
        %v1865 = vunpack.c.h.b16 %v764
        %v1866 = vunpack.c.l.b16 %v765
        %v1867 = vunpack.c.h.b16 %v765
        %v1868 = vunpack.c.l.b16 %v766
        %v1869 = vunpack.c.h.b16 %v766
        %v1870 = vunpack.c.l.b16 %v767
        %v1871 = vunpack.c.h.b16 %v767
        %v1872 = vunpack.c.l.b16 %v768
        %v1873 = vunpack.c.h.b16 %v768
        %v1874 = vunpack.c.l.b16 %v769
        %v1875 = vunpack.c.h.b16 %v769
        %v1876 = vunpack.c.l.b16 %v770
        %v1877 = vunpack.c.h.b16 %v770
        %v1878 = vunpack.c.l.b16 %v771
        %v1879 = vunpack.c.h.b16 %v771
        %v1880 = vunpack.c.l.b16 %v772
        %v1881 = vunpack.c.h.b16 %v772
        %v1882 = vunpack.c.l.b16 %v773
        %v1883 = vunpack.c.h.b16 %v773
        %v1884 = vunpack.c.l.b16 %v774
        %v1885 = vunpack.c.h.b16 %v774
        %v1886 = vunpack.c.l.b16 %v775
        %v1887 = vunpack.c.h.b16 %v775
        %v1888 = vunpack.c.l.b16 %v776
        %v1889 = vunpack.c.h.b16 %v776
        %v1890 = vunpack.c.l.b16 %v777
        %v1891 = vunpack.c.h.b16 %v777
        %v1892 = vunpack.c.l.b16 %v778
        %v1893 = vunpack.c.h.b16 %v778
        %v1894 = vunpack.c.l.b16 %v779
        %v1895 = vunpack.c.h.b16 %v779
        %v1896 = vunpack.c.l.b16 %v780
        %v1897 = vunpack.c.h.b16 %v780
        %v1898 = vunpack.c.l.b16 %v781
        %v1899 = vunpack.c.h.b16 %v781
        %v1900 = vunpack.c.l.b16 %v782
        %v1901 = vunpack.c.h.b16 %v782
        %v1902 = vunpack.c.l.b16 %v783
        %v1903 = vunpack.c.h.b16 %v783
        %v1904 = vunpack.c.l.b16 %v784
        %v1905 = vunpack.c.h.b16 %v784
        %v1906 = vunpack.c.l.b16 %v785
        %v1907 = vunpack.c.h.b16 %v785
        %v1908 = vunpack.c.l.b16 %v786
        %v1909 = vunpack.c.h.b16 %v786
        %v1910 = vunpack.c.l.b16 %v787
        %v1911 = vunpack.c.h.b16 %v787
        %v1912 = vunpack.c.l.b16 %v788
        %v1913 = vunpack.c.h.b16 %v788
        %v1914 = vunpack.c.l.b16 %v789
        %v1915 = vunpack.c.h.b16 %v789
        %v1916 = vunpack.c.l.b16 %v790
        %v1917 = vunpack.c.h.b16 %v790
        %v1918 = vunpack.c.l.b16 %v791
        %v1919 = vunpack.c.h.b16 %v791
        %v1920 = vunpack.c.l.b16 %v792
        %v1921 = vunpack.c.h.b16 %v792
        %v1922 = vunpack.c.l.b16 %v793
        %v1923 = vunpack.c.h.b16 %v793
        %v1924 = vunpack.c.l.b16 %v794
        %v1925 = vunpack.c.h.b16 %v794
        %v1926 = vunpack.c.l.b16 %v795
        %v1927 = vunpack.c.h.b16 %v795
        %v1928 = vunpack.c.l.b16 %v796
        %v1929 = vunpack.c.h.b16 %v796
        %v1930 = vunpack.c.l.b16 %v797
        %v1931 = vunpack.c.h.b16 %v797
        %v1932 = vunpack.c.l.b16 %v798
        %v1933 = vunpack.c.h.b16 %v798
        %v1934 = vunpack.c.l.b16 %v799
        %v1935 = vunpack.c.h.b16 %v799
        %v1936 = vunpack.c.l.b16 %v800
        %v1937 = vunpack.c.h.b16 %v800
        %v1938 = vunpack.c.l.b16 %v801
        %v1939 = vunpack.c.h.b16 %v801
        %v1940 = vunpack.c.l.b16 %v802
        %v1941 = vunpack.c.h.b16 %v802
        %v1942 = vunpack.c.l.b16 %v803
        %v1943 = vunpack.c.h.b16 %v803
        %v1944 = vunpack.c.l.b16 %v804
        %v1945 = vunpack.c.h.b16 %v804
        %v1946 = vunpack.c.l.b16 %v805
        %v1947 = vunpack.c.h.b16 %v805
        %v1948 = vunpack.c.l.b16 %v806
        %v1949 = vunpack.c.h.b16 %v806
        %v1950 = vunpack.c.l.b16 %v807
        %v1951 = vunpack.c.h.b16 %v807
        %v1952 = vunpack.c.l.b16 %v808
        %v1953 = vunpack.c.h.b16 %v808
        %v1954 = vunpack.c.l.b16 %v809
        %v1955 = vunpack.c.h.b16 %v809
        %v1956 = vunpack.c.l.b16 %v810
        %v1957 = vunpack.c.h.b16 %v810
        %v1958 = vunpack.c.l.b16 %v811
        %v1959 = vunpack.c.h.b16 %v811
        %v1960 = vunpack.c.l.b16 %v812
        %v1961 = vunpack.c.h.b16 %v812
        %v1962 = vunpack.c.l.b16 %v813
        %v1963 = vunpack.c.h.b16 %v813
        %v1964 = vunpack.c.l.b16 %v814
        %v1965 = vunpack.c.h.b16 %v814
        %v1966 = vunpack.c.l.b16 %v815
        %v1967 = vunpack.c.h.b16 %v815
        %v1968 = vunpack.c.l.b16 %v816
        %v1969 = vunpack.c.h.b16 %v816
        %v1970 = vunpack.c.l.b16 %v817
        %v1971 = vunpack.c.h.b16 %v817
        %v1972 = vunpack.c.l.b16 %v818
        %v1973 = vunpack.c.h.b16 %v818
        %v1974 = vunpack.c.l.b16 %v819
        %v1975 = vunpack.c.h.b16 %v819
        %v1976 = vunpack.c.l.b16 %v820
        %v1977 = vunpack.c.h.b16 %v820
        %v1978 = vunpack.c.l.b16 %v821
        %v1979 = vunpack.c.h.b16 %v821
        %v1980 = vpack.c.b16 %v1214, %v1212
        %v1981 = vpack.c.b16 %v1215, %v1213
        %v1982 = vpack.c.b16 %v1218, %v1216
        %v1983 = vpack.c.b16 %v1219, %v1217
        %v1984 = vpack.c.b16 %v1222, %v1220
        %v1985 = vpack.c.b16 %v1223, %v1221
        %v1986 = vpack.c.b16 %v1226, %v1224
        %v1987 = vpack.c.b16 %v1227, %v1225
        %v1988 = vpack.c.b16 %v1230, %v1228
        %v1989 = vpack.c.b16 %v1231, %v1229
        %v1990 = vpack.c.b16 %v1234, %v1232
        %v1991 = vpack.c.b16 %v1235, %v1233
        %v1992 = vpack.c.b16 %v1238, %v1236
        %v1993 = vpack.c.b16 %v1239, %v1237
        %v1994 = vpack.c.b16 %v1242, %v1240
        %v1995 = vpack.c.b16 %v1243, %v1241
        %v1996 = vpack.c.b16 %v1246, %v1244
        %v1997 = vpack.c.b16 %v1247, %v1245
        %v1998 = vpack.c.b16 %v1250, %v1248
        %v1999 = vpack.c.b16 %v1251, %v1249
        %v2000 = vpack.c.b16 %v1254, %v1252
        %v2001 = vpack.c.b16 %v1255, %v1253
        %v2002 = vpack.c.b16 %v1258, %v1256
        %v2003 = vpack.c.b16 %v1259, %v1257
        %v2004 = vpack.c.b16 %v1262, %v1260
        %v2005 = vpack.c.b16 %v1263, %v1261
        %v2006 = vpack.c.b16 %v1266, %v1264
        %v2007 = vpack.c.b16 %v1267, %v1265
        %v2008 = vpack.c.b16 %v1270, %v1268
        %v2009 = vpack.c.b16 %v1271, %v1269
        %v2010 = vpack.c.b16 %v1274, %v1272
        %v2011 = vpack.c.b16 %v1275, %v1273
        %v2012 = vpack.c.b16 %v1278, %v1276
        %v2013 = vpack.c.b16 %v1279, %v1277
        %v2014 = vpack.c.b16 %v1282, %v1280
        %v2015 = vpack.c.b16 %v1283, %v1281
        %v2016 = vpack.c.b16 %v1286, %v1284
        %v2017 = vpack.c.b16 %v1287, %v1285
        %v2018 = vpack.c.b16 %v1290, %v1288
        %v2019 = vpack.c.b16 %v1291, %v1289
        %v2020 = vpack.c.b16 %v1294, %v1292
        %v2021 = vpack.c.b16 %v1295, %v1293
        %v2022 = vpack.c.b16 %v1298, %v1296
        %v2023 = vpack.c.b16 %v1299, %v1297
        %v2024 = vpack.c.b16 %v1302, %v1300
        %v2025 = vpack.c.b16 %v1303, %v1301
        %v2026 = vpack.c.b16 %v1306, %v1304
        %v2027 = vpack.c.b16 %v1307, %v1305
        %v2028 = vpack.c.b16 %v1310, %v1308
        %v2029 = vpack.c.b16 %v1311, %v1309
        %v2030 = vpack.c.b16 %v1314, %v1312
        %v2031 = vpack.c.b16 %v1315, %v1313
        %v2032 = vpack.c.b16 %v1318, %v1316
        %v2033 = vpack.c.b16 %v1319, %v1317
        %v2034 = vpack.c.b16 %v1322, %v1320
        %v2035 = vpack.c.b16 %v1323, %v1321
        %v2036 = vpack.c.b16 %v1326, %v1324
        %v2037 = vpack.c.b16 %v1327, %v1325
        %v2038 = vpack.c.b16 %v1330, %v1328
        %v2039 = vpack.c.b16 %v1331, %v1329
        %v2040 = vpack.c.b16 %v1334, %v1332
        %v2041 = vpack.c.b16 %v1335, %v1333
        %v2042 = vpack.c.b16 %v1338, %v1336
        %v2043 = vpack.c.b16 %v1339, %v1337
        %v2044 = vpack.c.b16 %v1342, %v1340
        %v2045 = vpack.c.b16 %v1343, %v1341
        %v2046 = vpack.c.b16 %v1346, %v1344
        %v2047 = vpack.c.b16 %v1347, %v1345
        %v2048 = vpack.c.b16 %v1350, %v1348
        %v2049 = vpack.c.b16 %v1351, %v1349
        %v2050 = vpack.c.b16 %v1354, %v1352
        %v2051 = vpack.c.b16 %v1355, %v1353
        %v2052 = vpack.c.b16 %v1358, %v1356
        %v2053 = vpack.c.b16 %v1359, %v1357
        %v2054 = vpack.c.b16 %v1362, %v1360
        %v2055 = vpack.c.b16 %v1363, %v1361
        %v2056 = vpack.c.b16 %v1366, %v1364
        %v2057 = vpack.c.b16 %v1367, %v1365
        %v2058 = vpack.c.b16 %v1370, %v1368
        %v2059 = vpack.c.b16 %v1371, %v1369
        %v2060 = vpack.c.b16 %v1374, %v1372
        %v2061 = vpack.c.b16 %v1375, %v1373
        %v2062 = vpack.c.b16 %v1378, %v1376
        %v2063 = vpack.c.b16 %v1379, %v1377
        %v2064 = vpack.c.b16 %v1382, %v1380
        %v2065 = vpack.c.b16 %v1383, %v1381
        %v2066 = vpack.c.b16 %v1386, %v1384
        %v2067 = vpack.c.b16 %v1387, %v1385
        %v2068 = vpack.c.b16 %v1390, %v1388
        %v2069 = vpack.c.b16 %v1391, %v1389
        %v2070 = vpack.c.b16 %v1394, %v1392
        %v2071 = vpack.c.b16 %v1395, %v1393
        %v2072 = vpack.c.b16 %v1398, %v1396
        %v2073 = vpack.c.b16 %v1399, %v1397
        %v2074 = vpack.c.b16 %v1402, %v1400
        %v2075 = vpack.c.b16 %v1403, %v1401
        %v2076 = vpack.c.b16 %v1406, %v1404
        %v2077 = vpack.c.b16 %v1407, %v1405
        %v2078 = vpack.c.b16 %v1410, %v1408
        %v2079 = vpack.c.b16 %v1411, %v1409
        %v2080 = vpack.c.b16 %v1414, %v1412
        %v2081 = vpack.c.b16 %v1415, %v1413
        %v2082 = vpack.c.b16 %v1418, %v1416
        %v2083 = vpack.c.b16 %v1419, %v1417
        %v2084 = vpack.c.b16 %v1422, %v1420
        %v2085 = vpack.c.b16 %v1423, %v1421
        %v2086 = vpack.c.b16 %v1426, %v1424
        %v2087 = vpack.c.b16 %v1427, %v1425
        %v2088 = vpack.c.b16 %v1430, %v1428
        %v2089 = vpack.c.b16 %v1431, %v1429
        %v2090 = vpack.c.b16 %v1434, %v1432
        %v2091 = vpack.c.b16 %v1435, %v1433
        %v2092 = vpack.c.b16 %v1438, %v1436
        %v2093 = vpack.c.b16 %v1439, %v1437
        %v2094 = vpack.c.b16 %v1442, %v1440
        %v2095 = vpack.c.b16 %v1443, %v1441
        %v2096 = vpack.c.b16 %v1446, %v1444
        %v2097 = vpack.c.b16 %v1447, %v1445
        %v2098 = vpack.c.b16 %v1450, %v1448
        %v2099 = vpack.c.b16 %v1451, %v1449
        %v2100 = vpack.c.b16 %v1454, %v1452
        %v2101 = vpack.c.b16 %v1455, %v1453
        %v2102 = vpack.c.b16 %v1458, %v1456
        %v2103 = vpack.c.b16 %v1459, %v1457
        %v2104 = vpack.c.b16 %v1462, %v1460
        %v2105 = vpack.c.b16 %v1463, %v1461
        %v2106 = vpack.c.b16 %v1466, %v1464
        %v2107 = vpack.c.b16 %v1467, %v1465
        %v2108 = vpack.c.b16 %v1470, %v1468
        %v2109 = vpack.c.b16 %v1471, %v1469
        %v2110 = vpack.c.b16 %v1474, %v1472
        %v2111 = vpack.c.b16 %v1475, %v1473
        %v2112 = vpack.c.b16 %v1478, %v1476
        %v2113 = vpack.c.b16 %v1479, %v1477
        %v2114 = vpack.c.b16 %v1482, %v1480
        %v2115 = vpack.c.b16 %v1483, %v1481
        %v2116 = vpack.c.b16 %v1486, %v1484
        %v2117 = vpack.c.b16 %v1487, %v1485
        %v2118 = vpack.c.b16 %v1490, %v1488
        %v2119 = vpack.c.b16 %v1491, %v1489
        %v2120 = vpack.c.b16 %v1494, %v1492
        %v2121 = vpack.c.b16 %v1495, %v1493
        %v2122 = vpack.c.b16 %v1498, %v1496
        %v2123 = vpack.c.b16 %v1499, %v1497
        %v2124 = vpack.c.b16 %v1502, %v1500
        %v2125 = vpack.c.b16 %v1503, %v1501
        %v2126 = vpack.c.b16 %v1506, %v1504
        %v2127 = vpack.c.b16 %v1507, %v1505
        %v2128 = vpack.c.b16 %v1510, %v1508
        %v2129 = vpack.c.b16 %v1511, %v1509
        %v2130 = vpack.c.b16 %v1514, %v1512
        %v2131 = vpack.c.b16 %v1515, %v1513
        %v2132 = vpack.c.b16 %v1518, %v1516
        %v2133 = vpack.c.b16 %v1519, %v1517
        %v2134 = vpack.c.b16 %v1522, %v1520
        %v2135 = vpack.c.b16 %v1523, %v1521
        %v2136 = vpack.c.b16 %v1526, %v1524
        %v2137 = vpack.c.b16 %v1527, %v1525
        %v2138 = vpack.c.b16 %v1530, %v1528
        %v2139 = vpack.c.b16 %v1531, %v1529
        %v2140 = vpack.c.b16 %v1534, %v1532
        %v2141 = vpack.c.b16 %v1535, %v1533
        %v2142 = vpack.c.b16 %v1538, %v1536
        %v2143 = vpack.c.b16 %v1539, %v1537
        %v2144 = vpack.c.b16 %v1542, %v1540
        %v2145 = vpack.c.b16 %v1543, %v1541
        %v2146 = vpack.c.b16 %v1546, %v1544
        %v2147 = vpack.c.b16 %v1547, %v1545
        %v2148 = vpack.c.b16 %v1550, %v1548
        %v2149 = vpack.c.b16 %v1551, %v1549
        %v2150 = vpack.c.b16 %v1554, %v1552
        %v2151 = vpack.c.b16 %v1555, %v1553
        %v2152 = vpack.c.b16 %v1558, %v1556
        %v2153 = vpack.c.b16 %v1559, %v1557
        %v2154 = vpack.c.b16 %v1562, %v1560
        %v2155 = vpack.c.b16 %v1563, %v1561
        %v2156 = vpack.c.b16 %v1566, %v1564
        %v2157 = vpack.c.b16 %v1567, %v1565
        %v2158 = vpack.c.b16 %v1570, %v1568
        %v2159 = vpack.c.b16 %v1571, %v1569
        %v2160 = vpack.c.b16 %v1574, %v1572
        %v2161 = vpack.c.b16 %v1575, %v1573
        %v2162 = vpack.c.b16 %v1578, %v1576
        %v2163 = vpack.c.b16 %v1579, %v1577
        %v2164 = vpack.c.b16 %v1582, %v1580
        %v2165 = vpack.c.b16 %v1583, %v1581
        %v2166 = vpack.c.b16 %v1586, %v1584
        %v2167 = vpack.c.b16 %v1587, %v1585
        %v2168 = vpack.c.b16 %v1590, %v1588
        %v2169 = vpack.c.b16 %v1591, %v1589
        %v2170 = vpack.c.b16 %v1594, %v1592
        %v2171 = vpack.c.b16 %v1595, %v1593
        %v2172 = vpack.c.b16 %v1598, %v1596
        %v2173 = vpack.c.b16 %v1599, %v1597
        %v2174 = vpack.c.b16 %v1602, %v1600
        %v2175 = vpack.c.b16 %v1603, %v1601
        %v2176 = vpack.c.b16 %v1606, %v1604
        %v2177 = vpack.c.b16 %v1607, %v1605
        %v2178 = vpack.c.b16 %v1610, %v1608
        %v2179 = vpack.c.b16 %v1611, %v1609
        %v2180 = vpack.c.b16 %v1614, %v1612
        %v2181 = vpack.c.b16 %v1615, %v1613
        %v2182 = vpack.c.b16 %v1618, %v1616
        %v2183 = vpack.c.b16 %v1619, %v1617
        %v2184 = vpack.c.b16 %v1622, %v1620
        %v2185 = vpack.c.b16 %v1623, %v1621
        %v2186 = vpack.c.b16 %v1626, %v1624
        %v2187 = vpack.c.b16 %v1627, %v1625
        %v2188 = vpack.c.b16 %v1630, %v1628
        %v2189 = vpack.c.b16 %v1631, %v1629
        %v2190 = vpack.c.b16 %v1634, %v1632
        %v2191 = vpack.c.b16 %v1635, %v1633
        %v2192 = vpack.c.b16 %v1638, %v1636
        %v2193 = vpack.c.b16 %v1639, %v1637
        %v2194 = vpack.c.b16 %v1642, %v1640
        %v2195 = vpack.c.b16 %v1643, %v1641
        %v2196 = vpack.c.b16 %v1646, %v1644
        %v2197 = vpack.c.b16 %v1647, %v1645
        %v2198 = vpack.c.b16 %v1650, %v1648
        %v2199 = vpack.c.b16 %v1651, %v1649
        %v2200 = vpack.c.b16 %v1654, %v1652
        %v2201 = vpack.c.b16 %v1655, %v1653
        %v2202 = vpack.c.b16 %v1658, %v1656
        %v2203 = vpack.c.b16 %v1659, %v1657
        %v2204 = vpack.c.b16 %v1662, %v1660
        %v2205 = vpack.c.b16 %v1663, %v1661
        %v2206 = vpack.c.b16 %v1666, %v1664
        %v2207 = vpack.c.b16 %v1667, %v1665
        %v2208 = vpack.c.b16 %v1670, %v1668
        %v2209 = vpack.c.b16 %v1671, %v1669
        %v2210 = vpack.c.b16 %v1674, %v1672
        %v2211 = vpack.c.b16 %v1675, %v1673
        %v2212 = vpack.c.b16 %v1678, %v1676
        %v2213 = vpack.c.b16 %v1679, %v1677
        %v2214 = vpack.c.b16 %v1682, %v1680
        %v2215 = vpack.c.b16 %v1683, %v1681
        %v2216 = vpack.c.b16 %v1686, %v1684
        %v2217 = vpack.c.b16 %v1687, %v1685
        %v2218 = vpack.c.b16 %v1690, %v1688
        %v2219 = vpack.c.b16 %v1691, %v1689
        %v2220 = vpack.c.b16 %v1694, %v1692
        %v2221 = vpack.c.b16 %v1695, %v1693
        %v2222 = vpack.c.b16 %v1698, %v1696
        %v2223 = vpack.c.b16 %v1699, %v1697
        %v2224 = vpack.c.b16 %v1702, %v1700
        %v2225 = vpack.c.b16 %v1703, %v1701
        %v2226 = vpack.c.b16 %v1706, %v1704
        %v2227 = vpack.c.b16 %v1707, %v1705
        %v2228 = vpack.c.b16 %v1710, %v1708
        %v2229 = vpack.c.b16 %v1711, %v1709
        %v2230 = vpack.c.b16 %v1714, %v1712
        %v2231 = vpack.c.b16 %v1715, %v1713
        %v2232 = vpack.c.b16 %v1718, %v1716
        %v2233 = vpack.c.b16 %v1719, %v1717
        %v2234 = vpack.c.b16 %v1722, %v1720
        %v2235 = vpack.c.b16 %v1723, %v1721
        %v2236 = vpack.c.b16 %v1726, %v1724
        %v2237 = vpack.c.b16 %v1727, %v1725
        %v2238 = vpack.c.b16 %v1730, %v1728
        %v2239 = vpack.c.b16 %v1731, %v1729
        %v2240 = vpack.c.b16 %v1734, %v1732
        %v2241 = vpack.c.b16 %v1735, %v1733
        %v2242 = vpack.c.b16 %v1738, %v1736
        %v2243 = vpack.c.b16 %v1739, %v1737
        %v2244 = vpack.c.b16 %v1742, %v1740
        %v2245 = vpack.c.b16 %v1743, %v1741
        %v2246 = vpack.c.b16 %v1746, %v1744
        %v2247 = vpack.c.b16 %v1747, %v1745
        %v2248 = vpack.c.b16 %v1750, %v1748
        %v2249 = vpack.c.b16 %v1751, %v1749
        %v2250 = vpack.c.b16 %v1754, %v1752
        %v2251 = vpack.c.b16 %v1755, %v1753
        %v2252 = vpack.c.b16 %v1758, %v1756
        %v2253 = vpack.c.b16 %v1759, %v1757
        %v2254 = vpack.c.b16 %v1762, %v1760
        %v2255 = vpack.c.b16 %v1763, %v1761
        %v2256 = vpack.c.b16 %v1766, %v1764
        %v2257 = vpack.c.b16 %v1767, %v1765
        %v2258 = vpack.c.b16 %v1770, %v1768
        %v2259 = vpack.c.b16 %v1771, %v1769
        %v2260 = vpack.c.b16 %v1774, %v1772
        %v2261 = vpack.c.b16 %v1775, %v1773
        %v2262 = vpack.c.b16 %v1778, %v1776
        %v2263 = vpack.c.b16 %v1779, %v1777
        %v2264 = vpack.c.b16 %v1782, %v1780
        %v2265 = vpack.c.b16 %v1783, %v1781
        %v2266 = vpack.c.b16 %v1786, %v1784
        %v2267 = vpack.c.b16 %v1787, %v1785
        %v2268 = vpack.c.b16 %v1790, %v1788
        %v2269 = vpack.c.b16 %v1791, %v1789
        %v2270 = vpack.c.b16 %v1794, %v1792
        %v2271 = vpack.c.b16 %v1795, %v1793
        %v2272 = vpack.c.b16 %v1798, %v1796
        %v2273 = vpack.c.b16 %v1799, %v1797
        %v2274 = vpack.c.b16 %v1802, %v1800
        %v2275 = vpack.c.b16 %v1803, %v1801
        %v2276 = vpack.c.b16 %v1806, %v1804
        %v2277 = vpack.c.b16 %v1807, %v1805
        %v2278 = vpack.c.b16 %v1810, %v1808
        %v2279 = vpack.c.b16 %v1811, %v1809
        %v2280 = vpack.c.b16 %v1814, %v1812
        %v2281 = vpack.c.b16 %v1815, %v1813
        %v2282 = vpack.c.b16 %v1818, %v1816
        %v2283 = vpack.c.b16 %v1819, %v1817
        %v2284 = vpack.c.b16 %v1822, %v1820
        %v2285 = vpack.c.b16 %v1823, %v1821
        %v2286 = vpack.c.b16 %v1826, %v1824
        %v2287 = vpack.c.b16 %v1827, %v1825
        %v2288 = vpack.c.b16 %v1830, %v1828
        %v2289 = vpack.c.b16 %v1831, %v1829
        %v2290 = vpack.c.b16 %v1834, %v1832
        %v2291 = vpack.c.b16 %v1835, %v1833
        %v2292 = vpack.c.b16 %v1838, %v1836
        %v2293 = vpack.c.b16 %v1839, %v1837
        %v2294 = vpack.c.b16 %v1842, %v1840
        %v2295 = vpack.c.b16 %v1843, %v1841
        %v2296 = vpack.c.b16 %v1846, %v1844
        %v2297 = vpack.c.b16 %v1847, %v1845
        %v2298 = vpack.c.b16 %v1850, %v1848
        %v2299 = vpack.c.b16 %v1851, %v1849
        %v2300 = vpack.c.b16 %v1854, %v1852
        %v2301 = vpack.c.b16 %v1855, %v1853
        %v2302 = vpack.c.b16 %v1858, %v1856
        %v2303 = vpack.c.b16 %v1859, %v1857
        %v2304 = vpack.c.b16 %v1862, %v1860
        %v2305 = vpack.c.b16 %v1863, %v1861
        %v2306 = vpack.c.b16 %v1866, %v1864
        %v2307 = vpack.c.b16 %v1867, %v1865
        %v2308 = vpack.c.b16 %v1870, %v1868
        %v2309 = vpack.c.b16 %v1871, %v1869
        %v2310 = vpack.c.b16 %v1874, %v1872
        %v2311 = vpack.c.b16 %v1875, %v1873
        %v2312 = vpack.c.b16 %v1878, %v1876
        %v2313 = vpack.c.b16 %v1879, %v1877
        %v2314 = vpack.c.b16 %v1882, %v1880
        %v2315 = vpack.c.b16 %v1883, %v1881
        %v2316 = vpack.c.b16 %v1886, %v1884
        %v2317 = vpack.c.b16 %v1887, %v1885
        %v2318 = vpack.c.b16 %v1890, %v1888
        %v2319 = vpack.c.b16 %v1891, %v1889
        %v2320 = vpack.c.b16 %v1894, %v1892
        %v2321 = vpack.c.b16 %v1895, %v1893
        %v2322 = vpack.c.b16 %v1898, %v1896
        %v2323 = vpack.c.b16 %v1899, %v1897
        %v2324 = vpack.c.b16 %v1902, %v1900
        %v2325 = vpack.c.b16 %v1903, %v1901
        %v2326 = vpack.c.b16 %v1906, %v1904
        %v2327 = vpack.c.b16 %v1907, %v1905
        %v2328 = vpack.c.b16 %v1910, %v1908
        %v2329 = vpack.c.b16 %v1911, %v1909
        %v2330 = vpack.c.b16 %v1914, %v1912
        %v2331 = vpack.c.b16 %v1915, %v1913
        %v2332 = vpack.c.b16 %v1918, %v1916
        %v2333 = vpack.c.b16 %v1919, %v1917
        %v2334 = vpack.c.b16 %v1922, %v1920
        %v2335 = vpack.c.b16 %v1923, %v1921
        %v2336 = vpack.c.b16 %v1926, %v1924
        %v2337 = vpack.c.b16 %v1927, %v1925
        %v2338 = vpack.c.b16 %v1930, %v1928
        %v2339 = vpack.c.b16 %v1931, %v1929
        %v2340 = vpack.c.b16 %v1934, %v1932
        %v2341 = vpack.c.b16 %v1935, %v1933
        %v2342 = vpack.c.b16 %v1938, %v1936
        %v2343 = vpack.c.b16 %v1939, %v1937
        %v2344 = vpack.c.b16 %v1942, %v1940
        %v2345 = vpack.c.b16 %v1943, %v1941
        %v2346 = vpack.c.b16 %v1946, %v1944
        %v2347 = vpack.c.b16 %v1947, %v1945
        %v2348 = vpack.c.b16 %v1950, %v1948
        %v2349 = vpack.c.b16 %v1951, %v1949
        %v2350 = vpack.c.b16 %v1954, %v1952
        %v2351 = vpack.c.b16 %v1955, %v1953
        %v2352 = vpack.c.b16 %v1958, %v1956
        %v2353 = vpack.c.b16 %v1959, %v1957
        %v2354 = vpack.c.b16 %v1962, %v1960
        %v2355 = vpack.c.b16 %v1963, %v1961
        %v2356 = vpack.c.b16 %v1966, %v1964
        %v2357 = vpack.c.b16 %v1967, %v1965
        %v2358 = vpack.c.b16 %v1970, %v1968
        %v2359 = vpack.c.b16 %v1971, %v1969
        %v2360 = vpack.c.b16 %v1974, %v1972
        %v2361 = vpack.c.b16 %v1975, %v1973
        %v2362 = vpack.c.b16 %v1978, %v1976
        %v2363 = vpack.c.b16 %v1979, %v1977
        %2748 = vmatpush.bf16.msra.mxu0 %v1994
        %2749 = vmatpush.bf16.msra.mxu0 %v1992
        %2750 = vmatpush.bf16.msra.mxu0 %v1990
        %2751 = vmatpush.bf16.msra.mxu0 %v1988
        %2752 = vmatpush.bf16.msra.mxu0 %v1986
        %2753 = vmatpush.bf16.msra.mxu0 %v1984
        %2754 = vmatpush.bf16.msra.mxu0 %v1982
        %2755 = vmatpush.bf16.msra.mxu0 %v1980
        %2756 = vmatmul.bf16.gmra.mxu0 %v414
        %v2757 = vpop.f32.mrf.mxu0
        %v2758 = vadd.f32 %v824, %v2757
        %v2759 = vpop.f32.mrf.mxu0
        %2760 = vdwg.mxu0
        %2761 = vmatpush.bf16.msra.mxu0 %v2010
        %2762 = vmatpush.bf16.msra.mxu0 %v2008
        %2763 = vmatpush.bf16.msra.mxu0 %v2006
        %2764 = vmatpush.bf16.msra.mxu0 %v2004
        %2765 = vmatpush.bf16.msra.mxu0 %v2002
        %2766 = vmatpush.bf16.msra.mxu0 %v2000
        %2767 = vmatpush.bf16.msra.mxu0 %v1998
        %2768 = vmatpush.bf16.msra.mxu0 %v1996
        %2769 = vmatmul.bf16.gmra.mxu0 %v415
        %v2770 = vpop.f32.mrf.mxu0
        %v2771 = vadd.f32 %v2758, %v2770
        %v2772 = vpop.f32.mrf.mxu0
        %2773 = vdwg.mxu0
        %2774 = vmatpush.bf16.msra.mxu0 %v2026
        %2775 = vmatpush.bf16.msra.mxu0 %v2024
        %2776 = vmatpush.bf16.msra.mxu0 %v2022
        %2777 = vmatpush.bf16.msra.mxu0 %v2020
        %2778 = vmatpush.bf16.msra.mxu0 %v2018
        %2779 = vmatpush.bf16.msra.mxu0 %v2016
        %2780 = vmatpush.bf16.msra.mxu0 %v2014
        %2781 = vmatpush.bf16.msra.mxu0 %v2012
        %2782 = vmatmul.bf16.gmra.mxu0 %v416
        %v2783 = vpop.f32.mrf.mxu0
        %v2784 = vadd.f32 %v2771, %v2783
        %v2785 = vpop.f32.mrf.mxu0
        %2786 = vdwg.mxu0
        %2787 = vmatpush.bf16.msra.mxu0 %v2042
        %2788 = vmatpush.bf16.msra.mxu0 %v2040
        %2789 = vmatpush.bf16.msra.mxu0 %v2038
        %2790 = vmatpush.bf16.msra.mxu0 %v2036
        %2791 = vmatpush.bf16.msra.mxu0 %v2034
        %2792 = vmatpush.bf16.msra.mxu0 %v2032
        %2793 = vmatpush.bf16.msra.mxu0 %v2030
        %2794 = vmatpush.bf16.msra.mxu0 %v2028
        %2795 = vmatmul.bf16.gmra.mxu0 %v417
        %v2796 = vpop.f32.mrf.mxu0
        %v2797 = vadd.f32 %v2784, %v2796
        %v2798 = vpop.f32.mrf.mxu0
        %2799 = vdwg.mxu0
        %2800 = vmatpush.bf16.msra.mxu0 %v2058
        %2801 = vmatpush.bf16.msra.mxu0 %v2056
        %2802 = vmatpush.bf16.msra.mxu0 %v2054
        %2803 = vmatpush.bf16.msra.mxu0 %v2052
        %2804 = vmatpush.bf16.msra.mxu0 %v2050
        %2805 = vmatpush.bf16.msra.mxu0 %v2048
        %2806 = vmatpush.bf16.msra.mxu0 %v2046
        %2807 = vmatpush.bf16.msra.mxu0 %v2044
        %2808 = vmatmul.bf16.gmra.mxu0 %v418
        %v2809 = vpop.f32.mrf.mxu0
        %v2810 = vadd.f32 %v2797, %v2809
        %v2811 = vpop.f32.mrf.mxu0
        %2812 = vdwg.mxu0
        %2813 = vmatpush.bf16.msra.mxu0 %v2074
        %2814 = vmatpush.bf16.msra.mxu0 %v2072
        %2815 = vmatpush.bf16.msra.mxu0 %v2070
        %2816 = vmatpush.bf16.msra.mxu0 %v2068
        %2817 = vmatpush.bf16.msra.mxu0 %v2066
        %2818 = vmatpush.bf16.msra.mxu0 %v2064
        %2819 = vmatpush.bf16.msra.mxu0 %v2062
        %2820 = vmatpush.bf16.msra.mxu0 %v2060
        %2821 = vmatmul.bf16.gmra.mxu0 %v419
        %v2822 = vpop.f32.mrf.mxu0
        %v2823 = vadd.f32 %v2810, %v2822
        %v2824 = vpop.f32.mrf.mxu0
        %2825 = vdwg.mxu0
        %2826 = vmatpush.bf16.msra.mxu0 %v2090
        %2827 = vmatpush.bf16.msra.mxu0 %v2088
        %2828 = vmatpush.bf16.msra.mxu0 %v2086
        %2829 = vmatpush.bf16.msra.mxu0 %v2084
        %2830 = vmatpush.bf16.msra.mxu0 %v2082
        %2831 = vmatpush.bf16.msra.mxu0 %v2080
        %2832 = vmatpush.bf16.msra.mxu0 %v2078
        %2833 = vmatpush.bf16.msra.mxu0 %v2076
        %2834 = vmatmul.bf16.gmra.mxu0 %v420
        %v2835 = vpop.f32.mrf.mxu0
        %v2836 = vadd.f32 %v2823, %v2835
        %v2837 = vpop.f32.mrf.mxu0
        %2838 = vdwg.mxu0
        %2839 = vmatpush.bf16.msra.mxu0 %v2106
        %2840 = vmatpush.bf16.msra.mxu0 %v2104
        %2841 = vmatpush.bf16.msra.mxu0 %v2102
        %2842 = vmatpush.bf16.msra.mxu0 %v2100
        %2843 = vmatpush.bf16.msra.mxu0 %v2098
        %2844 = vmatpush.bf16.msra.mxu0 %v2096
        %2845 = vmatpush.bf16.msra.mxu0 %v2094
        %2846 = vmatpush.bf16.msra.mxu0 %v2092
        %2847 = vmatmul.bf16.gmra.mxu0 %v421
        %v2848 = vpop.f32.mrf.mxu0
        %v2849 = vadd.f32 %v2836, %v2848
        %v2850 = vpop.f32.mrf.mxu0
        %2851 = vdwg.mxu0
        %2852 = vmatpush.bf16.msra.mxu0 %v2122
        %2853 = vmatpush.bf16.msra.mxu0 %v2120
        %2854 = vmatpush.bf16.msra.mxu0 %v2118
        %2855 = vmatpush.bf16.msra.mxu0 %v2116
        %2856 = vmatpush.bf16.msra.mxu0 %v2114
        %2857 = vmatpush.bf16.msra.mxu0 %v2112
        %2858 = vmatpush.bf16.msra.mxu0 %v2110
        %2859 = vmatpush.bf16.msra.mxu0 %v2108
        %2860 = vmatmul.bf16.gmra.mxu0 %v422
        %v2861 = vpop.f32.mrf.mxu0
        %v2862 = vadd.f32 %v2849, %v2861
        %v2863 = vpop.f32.mrf.mxu0
        %2864 = vdwg.mxu0
        %2865 = vmatpush.bf16.msra.mxu0 %v2138
        %2866 = vmatpush.bf16.msra.mxu0 %v2136
        %2867 = vmatpush.bf16.msra.mxu0 %v2134
        %2868 = vmatpush.bf16.msra.mxu0 %v2132
        %2869 = vmatpush.bf16.msra.mxu0 %v2130
        %2870 = vmatpush.bf16.msra.mxu0 %v2128
        %2871 = vmatpush.bf16.msra.mxu0 %v2126
        %2872 = vmatpush.bf16.msra.mxu0 %v2124
        %2873 = vmatmul.bf16.gmra.mxu0 %v423
        %v2874 = vpop.f32.mrf.mxu0
        %v2875 = vadd.f32 %v2862, %v2874
        %v2876 = vpop.f32.mrf.mxu0
        %2877 = vdwg.mxu0
        %2878 = vmatpush.bf16.msra.mxu0 %v2154
        %2879 = vmatpush.bf16.msra.mxu0 %v2152
        %2880 = vmatpush.bf16.msra.mxu0 %v2150
        %2881 = vmatpush.bf16.msra.mxu0 %v2148
        %2882 = vmatpush.bf16.msra.mxu0 %v2146
        %2883 = vmatpush.bf16.msra.mxu0 %v2144
        %2884 = vmatpush.bf16.msra.mxu0 %v2142
        %2885 = vmatpush.bf16.msra.mxu0 %v2140
        %2886 = vmatmul.bf16.gmra.mxu0 %v424
        %v2887 = vpop.f32.mrf.mxu0
        %v2888 = vadd.f32 %v2875, %v2887
        %v2889 = vpop.f32.mrf.mxu0
        %2890 = vdwg.mxu0
        %2891 = vmatpush.bf16.msra.mxu0 %v2170
        %2892 = vmatpush.bf16.msra.mxu0 %v2168
        %2893 = vmatpush.bf16.msra.mxu0 %v2166
        %2894 = vmatpush.bf16.msra.mxu0 %v2164
        %2895 = vmatpush.bf16.msra.mxu0 %v2162
        %2896 = vmatpush.bf16.msra.mxu0 %v2160
        %2897 = vmatpush.bf16.msra.mxu0 %v2158
        %2898 = vmatpush.bf16.msra.mxu0 %v2156
        %2899 = vmatmul.bf16.gmra.mxu0 %v425
        %v2900 = vpop.f32.mrf.mxu0
        %v2901 = vadd.f32 %v2888, %v2900
        %v2902 = vpop.f32.mrf.mxu0
        %2903 = vdwg.mxu0
        %2904 = vmatpush.bf16.msra.mxu0 %v2186
        %2905 = vmatpush.bf16.msra.mxu0 %v2184
        %2906 = vmatpush.bf16.msra.mxu0 %v2182
        %2907 = vmatpush.bf16.msra.mxu0 %v2180
        %2908 = vmatpush.bf16.msra.mxu0 %v2178
        %2909 = vmatpush.bf16.msra.mxu0 %v2176
        %2910 = vmatpush.bf16.msra.mxu0 %v2174
        %2911 = vmatpush.bf16.msra.mxu0 %v2172
        %2912 = vmatmul.bf16.gmra.mxu0 %v426
        %v2913 = vpop.f32.mrf.mxu0
        %v2914 = vadd.f32 %v2901, %v2913
        %v2915 = vpop.f32.mrf.mxu0
        %2916 = vdwg.mxu0
        %2917 = vmatpush.bf16.msra.mxu0 %v2202
        %2918 = vmatpush.bf16.msra.mxu0 %v2200
        %2919 = vmatpush.bf16.msra.mxu0 %v2198
        %2920 = vmatpush.bf16.msra.mxu0 %v2196
        %2921 = vmatpush.bf16.msra.mxu0 %v2194
        %2922 = vmatpush.bf16.msra.mxu0 %v2192
        %2923 = vmatpush.bf16.msra.mxu0 %v2190
        %2924 = vmatpush.bf16.msra.mxu0 %v2188
        %2925 = vmatmul.bf16.gmra.mxu0 %v427
        %v2926 = vpop.f32.mrf.mxu0
        %v2927 = vadd.f32 %v2914, %v2926
        %v2928 = vpop.f32.mrf.mxu0
        %2929 = vdwg.mxu0
        %2930 = vmatpush.bf16.msra.mxu0 %v2218
        %2931 = vmatpush.bf16.msra.mxu0 %v2216
        %2932 = vmatpush.bf16.msra.mxu0 %v2214
        %2933 = vmatpush.bf16.msra.mxu0 %v2212
        %2934 = vmatpush.bf16.msra.mxu0 %v2210
        %2935 = vmatpush.bf16.msra.mxu0 %v2208
        %2936 = vmatpush.bf16.msra.mxu0 %v2206
        %2937 = vmatpush.bf16.msra.mxu0 %v2204
        %2938 = vmatmul.bf16.gmra.mxu0 %v428
        %v2939 = vpop.f32.mrf.mxu0
        %v2940 = vadd.f32 %v2927, %v2939
        %v2941 = vpop.f32.mrf.mxu0
        %2942 = vdwg.mxu0
        %2943 = vmatpush.bf16.msra.mxu0 %v2234
        %2944 = vmatpush.bf16.msra.mxu0 %v2232
        %2945 = vmatpush.bf16.msra.mxu0 %v2230
        %2946 = vmatpush.bf16.msra.mxu0 %v2228
        %2947 = vmatpush.bf16.msra.mxu0 %v2226
        %2948 = vmatpush.bf16.msra.mxu0 %v2224
        %2949 = vmatpush.bf16.msra.mxu0 %v2222
        %2950 = vmatpush.bf16.msra.mxu0 %v2220
        %2951 = vmatmul.bf16.gmra.mxu0 %v429
        %v2952 = vpop.f32.mrf.mxu0
        %v2953 = vadd.f32 %v2940, %v2952
        %v2954 = vpop.f32.mrf.mxu0
        %2955 = vdwg.mxu0
        %2956 = vmatpush.bf16.msra.mxu0 %v2250
        %2957 = vmatpush.bf16.msra.mxu0 %v2248
        %2958 = vmatpush.bf16.msra.mxu0 %v2246
        %2959 = vmatpush.bf16.msra.mxu0 %v2244
        %2960 = vmatpush.bf16.msra.mxu0 %v2242
        %2961 = vmatpush.bf16.msra.mxu0 %v2240
        %2962 = vmatpush.bf16.msra.mxu0 %v2238
        %2963 = vmatpush.bf16.msra.mxu0 %v2236
        %2964 = vmatmul.bf16.gmra.mxu0 %v430
        %v2965 = vpop.f32.mrf.mxu0
        %v2966 = vadd.f32 %v2953, %v2965
        %v2967 = vpop.f32.mrf.mxu0
        %2968 = vdwg.mxu0
        %2969 = vmatpush.bf16.msra.mxu0 %v2266
        %2970 = vmatpush.bf16.msra.mxu0 %v2264
        %2971 = vmatpush.bf16.msra.mxu0 %v2262
        %2972 = vmatpush.bf16.msra.mxu0 %v2260
        %2973 = vmatpush.bf16.msra.mxu0 %v2258
        %2974 = vmatpush.bf16.msra.mxu0 %v2256
        %2975 = vmatpush.bf16.msra.mxu0 %v2254
        %2976 = vmatpush.bf16.msra.mxu0 %v2252
        %2977 = vmatmul.bf16.gmra.mxu0 %v431
        %v2978 = vpop.f32.mrf.mxu0
        %v2979 = vadd.f32 %v2966, %v2978
        %v2980 = vpop.f32.mrf.mxu0
        %2981 = vdwg.mxu0
        %2982 = vmatpush.bf16.msra.mxu0 %v2282
        %2983 = vmatpush.bf16.msra.mxu0 %v2280
        %2984 = vmatpush.bf16.msra.mxu0 %v2278
        %2985 = vmatpush.bf16.msra.mxu0 %v2276
        %2986 = vmatpush.bf16.msra.mxu0 %v2274
        %2987 = vmatpush.bf16.msra.mxu0 %v2272
        %2988 = vmatpush.bf16.msra.mxu0 %v2270
        %2989 = vmatpush.bf16.msra.mxu0 %v2268
        %2990 = vmatmul.bf16.gmra.mxu0 %v432
        %v2991 = vpop.f32.mrf.mxu0
        %v2992 = vadd.f32 %v2979, %v2991
        %v2993 = vpop.f32.mrf.mxu0
        %2994 = vdwg.mxu0
        %2995 = vmatpush.bf16.msra.mxu0 %v2298
        %2996 = vmatpush.bf16.msra.mxu0 %v2296
        %2997 = vmatpush.bf16.msra.mxu0 %v2294
        %2998 = vmatpush.bf16.msra.mxu0 %v2292
        %2999 = vmatpush.bf16.msra.mxu0 %v2290
        %3000 = vmatpush.bf16.msra.mxu0 %v2288
        %3001 = vmatpush.bf16.msra.mxu0 %v2286
        %3002 = vmatpush.bf16.msra.mxu0 %v2284
        %3003 = vmatmul.bf16.gmra.mxu0 %v433
        %v3004 = vpop.f32.mrf.mxu0
        %v3005 = vadd.f32 %v2992, %v3004
        %v3006 = vpop.f32.mrf.mxu0
        %3007 = vdwg.mxu0
        %3008 = vmatpush.bf16.msra.mxu0 %v2314
        %3009 = vmatpush.bf16.msra.mxu0 %v2312
        %3010 = vmatpush.bf16.msra.mxu0 %v2310
        %3011 = vmatpush.bf16.msra.mxu0 %v2308
        %3012 = vmatpush.bf16.msra.mxu0 %v2306
        %3013 = vmatpush.bf16.msra.mxu0 %v2304
        %3014 = vmatpush.bf16.msra.mxu0 %v2302
        %3015 = vmatpush.bf16.msra.mxu0 %v2300
        %3016 = vmatmul.bf16.gmra.mxu0 %v434
        %v3017 = vpop.f32.mrf.mxu0
        %v3018 = vadd.f32 %v3005, %v3017
        %v3019 = vpop.f32.mrf.mxu0
        %3020 = vdwg.mxu0
        %3021 = vmatpush.bf16.msra.mxu0 %v2330
        %3022 = vmatpush.bf16.msra.mxu0 %v2328
        %3023 = vmatpush.bf16.msra.mxu0 %v2326
        %3024 = vmatpush.bf16.msra.mxu0 %v2324
        %3025 = vmatpush.bf16.msra.mxu0 %v2322
        %3026 = vmatpush.bf16.msra.mxu0 %v2320
        %3027 = vmatpush.bf16.msra.mxu0 %v2318
        %3028 = vmatpush.bf16.msra.mxu0 %v2316
        %3029 = vmatmul.bf16.gmra.mxu0 %v435
        %v3030 = vpop.f32.mrf.mxu0
        %v3031 = vadd.f32 %v3018, %v3030
        %v3032 = vpop.f32.mrf.mxu0
        %3033 = vdwg.mxu0
        %3034 = vmatpush.bf16.msra.mxu0 %v2346
        %3035 = vmatpush.bf16.msra.mxu0 %v2344
        %3036 = vmatpush.bf16.msra.mxu0 %v2342
        %3037 = vmatpush.bf16.msra.mxu0 %v2340
        %3038 = vmatpush.bf16.msra.mxu0 %v2338
        %3039 = vmatpush.bf16.msra.mxu0 %v2336
        %3040 = vmatpush.bf16.msra.mxu0 %v2334
        %3041 = vmatpush.bf16.msra.mxu0 %v2332
        %3042 = vmatmul.bf16.gmra.mxu0 %v436
        %v3043 = vpop.f32.mrf.mxu0
        %v3044 = vadd.f32 %v3031, %v3043
        %v3045 = vpop.f32.mrf.mxu0
        %3046 = vdwg.mxu0
        %3047 = vmatpush.bf16.msra.mxu0 %v2362
        %3048 = vmatpush.bf16.msra.mxu0 %v2360
        %3049 = vmatpush.bf16.msra.mxu0 %v2358
        %3050 = vmatpush.bf16.msra.mxu0 %v2356
        %3051 = vmatpush.bf16.msra.mxu0 %v2354
        %3052 = vmatpush.bf16.msra.mxu0 %v2352
        %3053 = vmatpush.bf16.msra.mxu0 %v2350
        %3054 = vmatpush.bf16.msra.mxu0 %v2348
        %3055 = vmatmul.bf16.gmra.mxu0 %v437
        %v3056 = vpop.f32.mrf.mxu0
        %v3057 = vadd.f32 %v3044, %v3056
        %v3058 = vpop.f32.mrf.mxu0
        %3059 = vdwg.mxu0
        %3060 = vmatpush.bf16.msra.mxu0 %v1995
        %3061 = vmatpush.bf16.msra.mxu0 %v1993
        %3062 = vmatpush.bf16.msra.mxu0 %v1991
        %3063 = vmatpush.bf16.msra.mxu0 %v1989
        %3064 = vmatpush.bf16.msra.mxu0 %v1987
        %3065 = vmatpush.bf16.msra.mxu0 %v1985
        %3066 = vmatpush.bf16.msra.mxu0 %v1983
        %3067 = vmatpush.bf16.msra.mxu0 %v1981
        %3068 = vmatmul.bf16.gmra.mxu0 %v414
        %v3069 = vpop.f32.mrf.mxu0
        %v3070 = vadd.f32 %v825, %v3069
        %v3071 = vpop.f32.mrf.mxu0
        %3072 = vdwg.mxu0
        %3073 = vmatpush.bf16.msra.mxu0 %v2011
        %3074 = vmatpush.bf16.msra.mxu0 %v2009
        %3075 = vmatpush.bf16.msra.mxu0 %v2007
        %3076 = vmatpush.bf16.msra.mxu0 %v2005
        %3077 = vmatpush.bf16.msra.mxu0 %v2003
        %3078 = vmatpush.bf16.msra.mxu0 %v2001
        %3079 = vmatpush.bf16.msra.mxu0 %v1999
        %3080 = vmatpush.bf16.msra.mxu0 %v1997
        %3081 = vmatmul.bf16.gmra.mxu0 %v415
        %v3082 = vpop.f32.mrf.mxu0
        %v3083 = vadd.f32 %v3070, %v3082
        %v3084 = vpop.f32.mrf.mxu0
        %3085 = vdwg.mxu0
        %3086 = vmatpush.bf16.msra.mxu0 %v2027
        %3087 = vmatpush.bf16.msra.mxu0 %v2025
        %3088 = vmatpush.bf16.msra.mxu0 %v2023
        %3089 = vmatpush.bf16.msra.mxu0 %v2021
        %3090 = vmatpush.bf16.msra.mxu0 %v2019
        %3091 = vmatpush.bf16.msra.mxu0 %v2017
        %3092 = vmatpush.bf16.msra.mxu0 %v2015
        %3093 = vmatpush.bf16.msra.mxu0 %v2013
        %3094 = vmatmul.bf16.gmra.mxu0 %v416
        %v3095 = vpop.f32.mrf.mxu0
        %v3096 = vadd.f32 %v3083, %v3095
        %v3097 = vpop.f32.mrf.mxu0
        %3098 = vdwg.mxu0
        %3099 = vmatpush.bf16.msra.mxu0 %v2043
        %3100 = vmatpush.bf16.msra.mxu0 %v2041
        %3101 = vmatpush.bf16.msra.mxu0 %v2039
        %3102 = vmatpush.bf16.msra.mxu0 %v2037
        %3103 = vmatpush.bf16.msra.mxu0 %v2035
        %3104 = vmatpush.bf16.msra.mxu0 %v2033
        %3105 = vmatpush.bf16.msra.mxu0 %v2031
        %3106 = vmatpush.bf16.msra.mxu0 %v2029
        %3107 = vmatmul.bf16.gmra.mxu0 %v417
        %v3108 = vpop.f32.mrf.mxu0
        %v3109 = vadd.f32 %v3096, %v3108
        %v3110 = vpop.f32.mrf.mxu0
        %3111 = vdwg.mxu0
        %3112 = vmatpush.bf16.msra.mxu0 %v2059
        %3113 = vmatpush.bf16.msra.mxu0 %v2057
        %3114 = vmatpush.bf16.msra.mxu0 %v2055
        %3115 = vmatpush.bf16.msra.mxu0 %v2053
        %3116 = vmatpush.bf16.msra.mxu0 %v2051
        %3117 = vmatpush.bf16.msra.mxu0 %v2049
        %3118 = vmatpush.bf16.msra.mxu0 %v2047
        %3119 = vmatpush.bf16.msra.mxu0 %v2045
        %3120 = vmatmul.bf16.gmra.mxu0 %v418
        %v3121 = vpop.f32.mrf.mxu0
        %v3122 = vadd.f32 %v3109, %v3121
        %v3123 = vpop.f32.mrf.mxu0
        %3124 = vdwg.mxu0
        %3125 = vmatpush.bf16.msra.mxu0 %v2075
        %3126 = vmatpush.bf16.msra.mxu0 %v2073
        %3127 = vmatpush.bf16.msra.mxu0 %v2071
        %3128 = vmatpush.bf16.msra.mxu0 %v2069
        %3129 = vmatpush.bf16.msra.mxu0 %v2067
        %3130 = vmatpush.bf16.msra.mxu0 %v2065
        %3131 = vmatpush.bf16.msra.mxu0 %v2063
        %3132 = vmatpush.bf16.msra.mxu0 %v2061
        %3133 = vmatmul.bf16.gmra.mxu0 %v419
        %v3134 = vpop.f32.mrf.mxu0
        %v3135 = vadd.f32 %v3122, %v3134
        %v3136 = vpop.f32.mrf.mxu0
        %3137 = vdwg.mxu0
        %3138 = vmatpush.bf16.msra.mxu0 %v2091
        %3139 = vmatpush.bf16.msra.mxu0 %v2089
        %3140 = vmatpush.bf16.msra.mxu0 %v2087
        %3141 = vmatpush.bf16.msra.mxu0 %v2085
        %3142 = vmatpush.bf16.msra.mxu0 %v2083
        %3143 = vmatpush.bf16.msra.mxu0 %v2081
        %3144 = vmatpush.bf16.msra.mxu0 %v2079
        %3145 = vmatpush.bf16.msra.mxu0 %v2077
        %3146 = vmatmul.bf16.gmra.mxu0 %v420
        %v3147 = vpop.f32.mrf.mxu0
        %v3148 = vadd.f32 %v3135, %v3147
        %v3149 = vpop.f32.mrf.mxu0
        %3150 = vdwg.mxu0
        %3151 = vmatpush.bf16.msra.mxu0 %v2107
        %3152 = vmatpush.bf16.msra.mxu0 %v2105
        %3153 = vmatpush.bf16.msra.mxu0 %v2103
        %3154 = vmatpush.bf16.msra.mxu0 %v2101
        %3155 = vmatpush.bf16.msra.mxu0 %v2099
        %3156 = vmatpush.bf16.msra.mxu0 %v2097
        %3157 = vmatpush.bf16.msra.mxu0 %v2095
        %3158 = vmatpush.bf16.msra.mxu0 %v2093
        %3159 = vmatmul.bf16.gmra.mxu0 %v421
        %v3160 = vpop.f32.mrf.mxu0
        %v3161 = vadd.f32 %v3148, %v3160
        %v3162 = vpop.f32.mrf.mxu0
        %3163 = vdwg.mxu0
        %3164 = vmatpush.bf16.msra.mxu0 %v2123
        %3165 = vmatpush.bf16.msra.mxu0 %v2121
        %3166 = vmatpush.bf16.msra.mxu0 %v2119
        %3167 = vmatpush.bf16.msra.mxu0 %v2117
        %3168 = vmatpush.bf16.msra.mxu0 %v2115
        %3169 = vmatpush.bf16.msra.mxu0 %v2113
        %3170 = vmatpush.bf16.msra.mxu0 %v2111
        %3171 = vmatpush.bf16.msra.mxu0 %v2109
        %3172 = vmatmul.bf16.gmra.mxu0 %v422
        %v3173 = vpop.f32.mrf.mxu0
        %v3174 = vadd.f32 %v3161, %v3173
        %v3175 = vpop.f32.mrf.mxu0
        %3176 = vdwg.mxu0
        %3177 = vmatpush.bf16.msra.mxu0 %v2139
        %3178 = vmatpush.bf16.msra.mxu0 %v2137
        %3179 = vmatpush.bf16.msra.mxu0 %v2135
        %3180 = vmatpush.bf16.msra.mxu0 %v2133
        %3181 = vmatpush.bf16.msra.mxu0 %v2131
        %3182 = vmatpush.bf16.msra.mxu0 %v2129
        %3183 = vmatpush.bf16.msra.mxu0 %v2127
        %3184 = vmatpush.bf16.msra.mxu0 %v2125
        %3185 = vmatmul.bf16.gmra.mxu0 %v423
        %v3186 = vpop.f32.mrf.mxu0
        %v3187 = vadd.f32 %v3174, %v3186
        %v3188 = vpop.f32.mrf.mxu0
        %3189 = vdwg.mxu0
        %3190 = vmatpush.bf16.msra.mxu0 %v2155
        %3191 = vmatpush.bf16.msra.mxu0 %v2153
        %3192 = vmatpush.bf16.msra.mxu0 %v2151
        %3193 = vmatpush.bf16.msra.mxu0 %v2149
        %3194 = vmatpush.bf16.msra.mxu0 %v2147
        %3195 = vmatpush.bf16.msra.mxu0 %v2145
        %3196 = vmatpush.bf16.msra.mxu0 %v2143
        %3197 = vmatpush.bf16.msra.mxu0 %v2141
        %3198 = vmatmul.bf16.gmra.mxu0 %v424
        %v3199 = vpop.f32.mrf.mxu0
        %v3200 = vadd.f32 %v3187, %v3199
        %v3201 = vpop.f32.mrf.mxu0
        %3202 = vdwg.mxu0
        %3203 = vmatpush.bf16.msra.mxu0 %v2171
        %3204 = vmatpush.bf16.msra.mxu0 %v2169
        %3205 = vmatpush.bf16.msra.mxu0 %v2167
        %3206 = vmatpush.bf16.msra.mxu0 %v2165
        %3207 = vmatpush.bf16.msra.mxu0 %v2163
        %3208 = vmatpush.bf16.msra.mxu0 %v2161
        %3209 = vmatpush.bf16.msra.mxu0 %v2159
        %3210 = vmatpush.bf16.msra.mxu0 %v2157
        %3211 = vmatmul.bf16.gmra.mxu0 %v425
        %v3212 = vpop.f32.mrf.mxu0
        %v3213 = vadd.f32 %v3200, %v3212
        %v3214 = vpop.f32.mrf.mxu0
        %3215 = vdwg.mxu0
        %3216 = vmatpush.bf16.msra.mxu0 %v2187
        %3217 = vmatpush.bf16.msra.mxu0 %v2185
        %3218 = vmatpush.bf16.msra.mxu0 %v2183
        %3219 = vmatpush.bf16.msra.mxu0 %v2181
        %3220 = vmatpush.bf16.msra.mxu0 %v2179
        %3221 = vmatpush.bf16.msra.mxu0 %v2177
        %3222 = vmatpush.bf16.msra.mxu0 %v2175
        %3223 = vmatpush.bf16.msra.mxu0 %v2173
        %3224 = vmatmul.bf16.gmra.mxu0 %v426
        %v3225 = vpop.f32.mrf.mxu0
        %v3226 = vadd.f32 %v3213, %v3225
        %v3227 = vpop.f32.mrf.mxu0
        %3228 = vdwg.mxu0
        %3229 = vmatpush.bf16.msra.mxu0 %v2203
        %3230 = vmatpush.bf16.msra.mxu0 %v2201
        %3231 = vmatpush.bf16.msra.mxu0 %v2199
        %3232 = vmatpush.bf16.msra.mxu0 %v2197
        %3233 = vmatpush.bf16.msra.mxu0 %v2195
        %3234 = vmatpush.bf16.msra.mxu0 %v2193
        %3235 = vmatpush.bf16.msra.mxu0 %v2191
        %3236 = vmatpush.bf16.msra.mxu0 %v2189
        %3237 = vmatmul.bf16.gmra.mxu0 %v427
        %v3238 = vpop.f32.mrf.mxu0
        %v3239 = vadd.f32 %v3226, %v3238
        %v3240 = vpop.f32.mrf.mxu0
        %3241 = vdwg.mxu0
        %3242 = vmatpush.bf16.msra.mxu0 %v2219
        %3243 = vmatpush.bf16.msra.mxu0 %v2217
        %3244 = vmatpush.bf16.msra.mxu0 %v2215
        %3245 = vmatpush.bf16.msra.mxu0 %v2213
        %3246 = vmatpush.bf16.msra.mxu0 %v2211
        %3247 = vmatpush.bf16.msra.mxu0 %v2209
        %3248 = vmatpush.bf16.msra.mxu0 %v2207
        %3249 = vmatpush.bf16.msra.mxu0 %v2205
        %3250 = vmatmul.bf16.gmra.mxu0 %v428
        %v3251 = vpop.f32.mrf.mxu0
        %v3252 = vadd.f32 %v3239, %v3251
        %v3253 = vpop.f32.mrf.mxu0
        %3254 = vdwg.mxu0
        %3255 = vmatpush.bf16.msra.mxu0 %v2235
        %3256 = vmatpush.bf16.msra.mxu0 %v2233
        %3257 = vmatpush.bf16.msra.mxu0 %v2231
        %3258 = vmatpush.bf16.msra.mxu0 %v2229
        %3259 = vmatpush.bf16.msra.mxu0 %v2227
        %3260 = vmatpush.bf16.msra.mxu0 %v2225
        %3261 = vmatpush.bf16.msra.mxu0 %v2223
        %3262 = vmatpush.bf16.msra.mxu0 %v2221
        %3263 = vmatmul.bf16.gmra.mxu0 %v429
        %v3264 = vpop.f32.mrf.mxu0
        %v3265 = vadd.f32 %v3252, %v3264
        %v3266 = vpop.f32.mrf.mxu0
        %3267 = vdwg.mxu0
        %3268 = vmatpush.bf16.msra.mxu0 %v2251
        %3269 = vmatpush.bf16.msra.mxu0 %v2249
        %3270 = vmatpush.bf16.msra.mxu0 %v2247
        %3271 = vmatpush.bf16.msra.mxu0 %v2245
        %3272 = vmatpush.bf16.msra.mxu0 %v2243
        %3273 = vmatpush.bf16.msra.mxu0 %v2241
        %3274 = vmatpush.bf16.msra.mxu0 %v2239
        %3275 = vmatpush.bf16.msra.mxu0 %v2237
        %3276 = vmatmul.bf16.gmra.mxu0 %v430
        %v3277 = vpop.f32.mrf.mxu0
        %v3278 = vadd.f32 %v3265, %v3277
        %v3279 = vpop.f32.mrf.mxu0
        %3280 = vdwg.mxu0
        %3281 = vmatpush.bf16.msra.mxu0 %v2267
        %3282 = vmatpush.bf16.msra.mxu0 %v2265
        %3283 = vmatpush.bf16.msra.mxu0 %v2263
        %3284 = vmatpush.bf16.msra.mxu0 %v2261
        %3285 = vmatpush.bf16.msra.mxu0 %v2259
        %3286 = vmatpush.bf16.msra.mxu0 %v2257
        %3287 = vmatpush.bf16.msra.mxu0 %v2255
        %3288 = vmatpush.bf16.msra.mxu0 %v2253
        %3289 = vmatmul.bf16.gmra.mxu0 %v431
        %v3290 = vpop.f32.mrf.mxu0
        %v3291 = vadd.f32 %v3278, %v3290
        %v3292 = vpop.f32.mrf.mxu0
        %3293 = vdwg.mxu0
        %3294 = vmatpush.bf16.msra.mxu0 %v2283
        %3295 = vmatpush.bf16.msra.mxu0 %v2281
        %3296 = vmatpush.bf16.msra.mxu0 %v2279
        %3297 = vmatpush.bf16.msra.mxu0 %v2277
        %3298 = vmatpush.bf16.msra.mxu0 %v2275
        %3299 = vmatpush.bf16.msra.mxu0 %v2273
        %3300 = vmatpush.bf16.msra.mxu0 %v2271
        %3301 = vmatpush.bf16.msra.mxu0 %v2269
        %3302 = vmatmul.bf16.gmra.mxu0 %v432
        %v3303 = vpop.f32.mrf.mxu0
        %v3304 = vadd.f32 %v3291, %v3303
        %v3305 = vpop.f32.mrf.mxu0
        %3306 = vdwg.mxu0
        %3307 = vmatpush.bf16.msra.mxu0 %v2299
        %3308 = vmatpush.bf16.msra.mxu0 %v2297
        %3309 = vmatpush.bf16.msra.mxu0 %v2295
        %3310 = vmatpush.bf16.msra.mxu0 %v2293
        %3311 = vmatpush.bf16.msra.mxu0 %v2291
        %3312 = vmatpush.bf16.msra.mxu0 %v2289
        %3313 = vmatpush.bf16.msra.mxu0 %v2287
        %3314 = vmatpush.bf16.msra.mxu0 %v2285
        %3315 = vmatmul.bf16.gmra.mxu0 %v433
        %v3316 = vpop.f32.mrf.mxu0
        %v3317 = vadd.f32 %v3304, %v3316
        %v3318 = vpop.f32.mrf.mxu0
        %3319 = vdwg.mxu0
        %3320 = vmatpush.bf16.msra.mxu0 %v2315
        %3321 = vmatpush.bf16.msra.mxu0 %v2313
        %3322 = vmatpush.bf16.msra.mxu0 %v2311
        %3323 = vmatpush.bf16.msra.mxu0 %v2309
        %3324 = vmatpush.bf16.msra.mxu0 %v2307
        %3325 = vmatpush.bf16.msra.mxu0 %v2305
        %3326 = vmatpush.bf16.msra.mxu0 %v2303
        %3327 = vmatpush.bf16.msra.mxu0 %v2301
        %3328 = vmatmul.bf16.gmra.mxu0 %v434
        %v3329 = vpop.f32.mrf.mxu0
        %v3330 = vadd.f32 %v3317, %v3329
        %v3331 = vpop.f32.mrf.mxu0
        %3332 = vdwg.mxu0
        %3333 = vmatpush.bf16.msra.mxu0 %v2331
        %3334 = vmatpush.bf16.msra.mxu0 %v2329
        %3335 = vmatpush.bf16.msra.mxu0 %v2327
        %3336 = vmatpush.bf16.msra.mxu0 %v2325
        %3337 = vmatpush.bf16.msra.mxu0 %v2323
        %3338 = vmatpush.bf16.msra.mxu0 %v2321
        %3339 = vmatpush.bf16.msra.mxu0 %v2319
        %3340 = vmatpush.bf16.msra.mxu0 %v2317
        %3341 = vmatmul.bf16.gmra.mxu0 %v435
        %v3342 = vpop.f32.mrf.mxu0
        %v3343 = vadd.f32 %v3330, %v3342
        %v3344 = vpop.f32.mrf.mxu0
        %3345 = vdwg.mxu0
        %3346 = vmatpush.bf16.msra.mxu0 %v2347
        %3347 = vmatpush.bf16.msra.mxu0 %v2345
        %3348 = vmatpush.bf16.msra.mxu0 %v2343
        %3349 = vmatpush.bf16.msra.mxu0 %v2341
        %3350 = vmatpush.bf16.msra.mxu0 %v2339
        %3351 = vmatpush.bf16.msra.mxu0 %v2337
        %3352 = vmatpush.bf16.msra.mxu0 %v2335
        %3353 = vmatpush.bf16.msra.mxu0 %v2333
        %3354 = vmatmul.bf16.gmra.mxu0 %v436
        %v3355 = vpop.f32.mrf.mxu0
        %v3356 = vadd.f32 %v3343, %v3355
        %v3357 = vpop.f32.mrf.mxu0
        %3358 = vdwg.mxu0
        %3359 = vmatpush.bf16.msra.mxu0 %v2363
        %3360 = vmatpush.bf16.msra.mxu0 %v2361
        %3361 = vmatpush.bf16.msra.mxu0 %v2359
        %3362 = vmatpush.bf16.msra.mxu0 %v2357
        %3363 = vmatpush.bf16.msra.mxu0 %v2355
        %3364 = vmatpush.bf16.msra.mxu0 %v2353
        %3365 = vmatpush.bf16.msra.mxu0 %v2351
        %3366 = vmatpush.bf16.msra.mxu0 %v2349
        %3367 = vmatmul.bf16.gmra.mxu0 %v437
        %v3368 = vpop.f32.mrf.mxu0
        %v3369 = vadd.f32 %v3356, %v3368
        %v3370 = vpop.f32.mrf.mxu0
        %3371 = vdwg.mxu0
        %v3372 = vmax.f32 %v3057, 0.0
        %v3373 = vmax.f32 %v3369, 0.0
        %v3374 = vpack.c.bf16 %v3372, %v3372
        %v3375 = vpack.c.bf16 %v3373, %v3373
        %v3376 = vld [vmem:[#allocation8] sm:$0xf]
        %v3377 = vld [vmem:[#allocation8 + $0x4] sm:$0xf]
        %v3378 = vld [vmem:[#allocation8 + $0x8] sm:$0xf]
        %v3379 = vld [vmem:[#allocation8 + $0xc] sm:$0xf]
        %v3380 = vld [vmem:[#allocation8 + $0x10] sm:$0xf]
        %v3381 = vld [vmem:[#allocation8 + $0x14] sm:$0xf]
        %v3382 = vld [vmem:[#allocation8 + $0x18] sm:$0xf]
        %v3383 = vld [vmem:[#allocation8 + $0x1c] sm:$0xf]
        %v3384 = vld [vmem:[#allocation8 + $0x20] sm:$0xf]
        %v3385 = vld [vmem:[#allocation8 + $0x24] sm:$0xf]
        %v3386 = vld [vmem:[#allocation8 + $0x28] sm:$0xf]
        %v3387 = vld [vmem:[#allocation8 + $0x2c] sm:$0xf]
        %v3388 = vld [vmem:[#allocation8 + $0x30] sm:$0xf]
        %v3389 = vld [vmem:[#allocation8 + $0x34] sm:$0xf]
        %v3390 = vld [vmem:[#allocation8 + $0x38] sm:$0xf]
        %v3391 = vld [vmem:[#allocation8 + $0x3c] sm:$0xf]
        %v3392 = vld [vmem:[#allocation8 + $0x40] sm:$0xf]
        %v3393 = vld [vmem:[#allocation8 + $0x44] sm:$0xf]
        %v3394 = vld [vmem:[#allocation8 + $0x48] sm:$0xf]
        %v3395 = vld [vmem:[#allocation8 + $0x4c] sm:$0xf]
        %v3396 = vld [vmem:[#allocation8 + $0x50] sm:$0xf]
        %v3397 = vld [vmem:[#allocation8 + $0x54] sm:$0xf]
        %v3398 = vld [vmem:[#allocation8 + $0x58] sm:$0xf]
        %v3399 = vld [vmem:[#allocation8 + $0x5c] sm:$0xf]
        %v3400 = vld [vmem:[#allocation8 + $0x60] sm:$0xf]
        %v3401 = vld [vmem:[#allocation8 + $0x64] sm:$0xf]
        %v3402 = vld [vmem:[#allocation8 + $0x68] sm:$0xf]
        %v3403 = vld [vmem:[#allocation8 + $0x6c] sm:$0xf]
        %v3404 = vld [vmem:[#allocation8 + $0x70] sm:$0xf]
        %v3405 = vld [vmem:[#allocation8 + $0x74] sm:$0xf]
        %v3406 = vld [vmem:[#allocation8 + $0x78] sm:$0xf]
        %v3407 = vld [vmem:[#allocation8 + $0x7c] sm:$0xf]
        %v3408 = vld [vmem:[#allocation10] sm:$0x1]
        %v3410 = vperm.slane %v3408, 0
        %v3444 = vunpack.c.l.b16 %v3376
        %v3445 = vunpack.c.l.b16 %v3377
        %v3446 = vunpack.c.l.b16 %v3378
        %v3447 = vunpack.c.l.b16 %v3379
        %v3448 = vunpack.c.l.b16 %v3380
        %v3449 = vunpack.c.l.b16 %v3381
        %v3450 = vunpack.c.l.b16 %v3382
        %v3451 = vunpack.c.l.b16 %v3383
        %v3452 = vunpack.c.l.b16 %v3384
        %v3453 = vunpack.c.l.b16 %v3385
        %v3454 = vunpack.c.l.b16 %v3386
        %v3455 = vunpack.c.l.b16 %v3387
        %v3456 = vunpack.c.l.b16 %v3388
        %v3457 = vunpack.c.l.b16 %v3389
        %v3458 = vunpack.c.l.b16 %v3390
        %v3459 = vunpack.c.l.b16 %v3391
        %v3460 = vunpack.c.l.b16 %v3392
        %v3461 = vunpack.c.l.b16 %v3393
        %v3462 = vunpack.c.l.b16 %v3394
        %v3463 = vunpack.c.l.b16 %v3395
        %v3464 = vunpack.c.l.b16 %v3396
        %v3465 = vunpack.c.l.b16 %v3397
        %v3466 = vunpack.c.l.b16 %v3398
        %v3467 = vunpack.c.l.b16 %v3399
        %v3468 = vunpack.c.l.b16 %v3400
        %v3469 = vunpack.c.l.b16 %v3401
        %v3470 = vunpack.c.l.b16 %v3402
        %v3471 = vunpack.c.l.b16 %v3403
        %v3472 = vunpack.c.l.b16 %v3404
        %v3473 = vunpack.c.l.b16 %v3405
        %v3474 = vunpack.c.l.b16 %v3406
        %v3475 = vunpack.c.l.b16 %v3407
        %v3476 = vpack.c.b16 %v3445, %v3444
        %v3477 = vpack.c.b16 %v3447, %v3446
        %v3478 = vpack.c.b16 %v3449, %v3448
        %v3479 = vpack.c.b16 %v3451, %v3450
        %v3480 = vpack.c.b16 %v3453, %v3452
        %v3481 = vpack.c.b16 %v3455, %v3454
        %v3482 = vpack.c.b16 %v3457, %v3456
        %v3483 = vpack.c.b16 %v3459, %v3458
        %v3484 = vpack.c.b16 %v3461, %v3460
        %v3485 = vpack.c.b16 %v3463, %v3462
        %v3486 = vpack.c.b16 %v3465, %v3464
        %v3487 = vpack.c.b16 %v3467, %v3466
        %v3488 = vpack.c.b16 %v3469, %v3468
        %v3489 = vpack.c.b16 %v3471, %v3470
        %v3490 = vpack.c.b16 %v3473, %v3472
        %v3491 = vpack.c.b16 %v3475, %v3474
        %3508 = vmatpush.bf16.msra.mxu0 %v3483
        %3509 = vmatpush.bf16.msra.mxu0 %v3482
        %3510 = vmatpush.bf16.msra.mxu0 %v3481
        %3511 = vmatpush.bf16.msra.mxu0 %v3480
        %3512 = vmatpush.bf16.msra.mxu0 %v3479
        %3513 = vmatpush.bf16.msra.mxu0 %v3478
        %3514 = vmatpush.bf16.msra.mxu0 %v3477
        %3515 = vmatpush.bf16.msra.mxu0 %v3476
        %3516 = vmatmul.bf16.gmra.mxu0 %v3374
        %v3517 = vpop.f32.mrf.mxu0
        %v3518 = vadd.f32 %v3410, %v3517
        %v3519 = vpop.f32.mrf.mxu0
        %3520 = vdwg.mxu0
        %3521 = vmatpush.bf16.msra.mxu0 %v3491
        %3522 = vmatpush.bf16.msra.mxu0 %v3490
        %3523 = vmatpush.bf16.msra.mxu0 %v3489
        %3524 = vmatpush.bf16.msra.mxu0 %v3488
        %3525 = vmatpush.bf16.msra.mxu0 %v3487
        %3526 = vmatpush.bf16.msra.mxu0 %v3486
        %3527 = vmatpush.bf16.msra.mxu0 %v3485
        %3528 = vmatpush.bf16.msra.mxu0 %v3484
        %3529 = vmatmul.bf16.gmra.mxu0 %v3375
        %v3530 = vpop.f32.mrf.mxu0
        %v3531 = vadd.f32 %v3518, %v3530
        %v3532 = vpop.f32.mrf.mxu0
        %3533 = vdwg.mxu0
        %v3534 = vmax.f32 %v3531, 0.0
        %v3535 = vpack.c.bf16 %v3534, %v3534
        %v3536 = vld [vmem:[#allocation11] sm:$0xf]
        %v3537 = vld [vmem:[#allocation11 + $0x4] sm:$0xf]
        %v3538 = vld [vmem:[#allocation11 + $0x8] sm:$0xf]
        %v3539 = vld [vmem:[#allocation11 + $0xc] sm:$0xf]
        %v3540 = vld [vmem:[#allocation11 + $0x10] sm:$0xf]
        %v3541 = vld [vmem:[#allocation11 + $0x14] sm:$0xf]
        %v3542 = vld [vmem:[#allocation11 + $0x18] sm:$0xf]
        %v3543 = vld [vmem:[#allocation11 + $0x1c] sm:$0xf]
        %v3544 = vld [vmem:[#allocation11 + $0x20] sm:$0xf]
        %v3545 = vld [vmem:[#allocation11 + $0x24] sm:$0xf]
        %v3546 = vld [vmem:[#allocation11 + $0x28] sm:$0xf]
        %v3547 = vld [vmem:[#allocation11 + $0x2c] sm:$0xf]
        %v3548 = vld [vmem:[#allocation11 + $0x30] sm:$0xf]
        %v3549 = vld [vmem:[#allocation11 + $0x34] sm:$0xf]
        %v3550 = vld [vmem:[#allocation11 + $0x38] sm:$0xf]
        %v3551 = vld [vmem:[#allocation11 + $0x3c] sm:$0xf]
        %v3552 = vld [vmem:[#allocation13] sm:$0x1]
        %v3554 = vperm.slane %v3552, 0
        %v3572 = vunpack.c.l.b16 %v3536
        %v3573 = vunpack.c.l.b16 %v3537
        %v3574 = vunpack.c.l.b16 %v3538
        %v3575 = vunpack.c.l.b16 %v3539
        %v3576 = vunpack.c.l.b16 %v3540
        %v3577 = vunpack.c.l.b16 %v3541
        %v3578 = vunpack.c.l.b16 %v3542
        %v3579 = vunpack.c.l.b16 %v3543
        %v3580 = vunpack.c.l.b16 %v3544
        %v3581 = vunpack.c.l.b16 %v3545
        %v3582 = vunpack.c.l.b16 %v3546
        %v3583 = vunpack.c.l.b16 %v3547
        %v3584 = vunpack.c.l.b16 %v3548
        %v3585 = vunpack.c.l.b16 %v3549
        %v3586 = vunpack.c.l.b16 %v3550
        %v3587 = vunpack.c.l.b16 %v3551
        %v3588 = vpack.c.b16 %v3573, %v3572
        %v3589 = vpack.c.b16 %v3575, %v3574
        %v3590 = vpack.c.b16 %v3577, %v3576
        %v3591 = vpack.c.b16 %v3579, %v3578
        %v3592 = vpack.c.b16 %v3581, %v3580
        %v3593 = vpack.c.b16 %v3583, %v3582
        %v3594 = vpack.c.b16 %v3585, %v3584
        %v3595 = vpack.c.b16 %v3587, %v3586
        %3604 = vmatpush.bf16.msra.mxu0 %v3595
        %3605 = vmatpush.bf16.msra.mxu0 %v3594
        %3606 = vmatpush.bf16.msra.mxu0 %v3593
        %3607 = vmatpush.bf16.msra.mxu0 %v3592
        %3608 = vmatpush.bf16.msra.mxu0 %v3591
        %3609 = vmatpush.bf16.msra.mxu0 %v3590
        %3610 = vmatpush.bf16.msra.mxu0 %v3589
        %3611 = vmatpush.bf16.msra.mxu0 %v3588
        %3612 = vmatmul.bf16.gmra.mxu0 %v3535
        %v3613 = vpop.f32.mrf.mxu0
        %v3614 = vadd.f32 %v3554, %v3613
        %v3615 = vpop.f32.mrf.mxu0
        %3616 = vdwg.mxu0
        %v3617 = vmax.f32 %v3614, 0.0
        %3618 = vst [vmem:[%s389] sm:$0xff] %v3617
        %s3619 = sand.u32 %s187, 1
        %s3620 = scalar_lea.sflag [#allocation4], %s3619
        %s3621 = sand.u32 %s187, 1
        %s3622 = smul.addr %s3621, 8
        %s3623 = scalar_lea.vmem [#allocation14], %s3622
        // Predicated region
        $region77: #{mlp_forward.1} parent=47 // pred_check
          %p3624 = pneg %p197
        $region78: #{mlp_forward.1} parent=47 // pred_check_branch
          %3626 = sbr.rel (%p3624) target = $region80
        $region79: #{mlp_forward.1} parent=47 // pred_region
          %3628 = vsyncadd %s3620, 0
          %s3629 = smul.addr %s27, 8
          %s3630 = scalar_lea.hbm %s7, %s3629
          %s3632 = sshll.u32 %s3623, 4
          %s3633 = int_to_ptr.vmem [resolvable:$true] %s3632
          %s3634 = sshll.u32 %s3630, 4
          %s3635 = int_to_ptr.hbm [resolvable:$true] %s3634
          %3637 = dma.vmem_to_hbm [thread:$0]  %s3633, 128, %s3635, %s3620
        $region80: #{mlp_forward.1} parent=47 // pred_fallthru
          _
      $region48: #{mlp_forward.1} parent=5 // pred_fallthru
        _
      %p3638 = scmp.le.s32.totalorder 2, %s22
      // Predicated region
      $region81: #{mlp_forward.1} parent=5 // pred_check
        %p3639 = pneg %p3638
      $region82: #{mlp_forward.1} parent=5 // pred_check_branch
        %3641 = sbr.rel (%p3639) target = $region84
      $region83: #{mlp_forward.1} parent=5 // pred_region
        %s3642 = ssub.s32 %s22, 2
        // Predicated region
        $region85: #{mlp_forward.1} parent=83 // pred_check
          %p3643 = pneg %p203
        $region86: #{mlp_forward.1} parent=83 // pred_check_branch
          %3645 = sbr.rel (%p3643) target = $region88
        $region87: #{mlp_forward.1} parent=83 // pred_region
          %s3646 = sand.u32 %s188, 1
          %s3647 = scalar_lea.sflag [#allocation4], %s3646
          %s3648 = sand.u32 %s188, 1
          %s3649 = smul.addr %s3648, 8
          %s3650 = scalar_lea.vmem [#allocation14], %s3649
          %3652 = dma.done %s3647, 128
        $region88: #{mlp_forward.1} parent=83 // pred_fallthru
          _
      $region84: #{mlp_forward.1} parent=5 // pred_fallthru
        _
    $region6: #{mlp_forward.1} parent=1 // loop_footer
      %s26 = sadd.s32 1, %s22
    $region7: #{mlp_forward.1} parent=1 // loop_footer_branch
      %21 = sbr.rel target = $region3
    $region8: #{mlp_forward.1} parent=1 // loop_exit
      _
    %3653 = vsyncpa [#allocation3], 1
    %s3654 = scalar_lea.sflag [#allocation3], 1
    %3655 = vsyncpa %s3654, 1
    %3656 = vsyncpa [#allocation6], 1
    %3657 = vsyncpa [#allocation9], 1
    %3658 = vsyncpa [#allocation12], 1
    %3659 = vsyncpa [#allocation4], 1
    %s3660 = scalar_lea.sflag [#allocation4], 1
    %3661 = vsyncpa %s3660, 1

</llo_original>
